<compile_context>
chip_gen: v5e
topology: v5e:2x2
jax: 0.10.0
libtpu: 0.0.40
codegen_flags: <defaults>
</compile_context>

<pallas_src>
import functools
import math

import jax
import jax.numpy as jnp
from jax.experimental import pallas as pl
from jax.experimental.pallas import tpu as pltpu

_APPROX_RECIP = True  # debug toggle: False -> exact softmax normalizer


# ---------------------------------------------------------------------------
# Pallas kernels
# ---------------------------------------------------------------------------

def _layernorm(x, w, eps=1e-5):
    # x: (T, C) f32, w: (1, C) f32. Stats in f32.
    mean = jnp.mean(x, axis=-1, keepdims=True)
    var = jnp.mean((x - mean) ** 2, axis=-1, keepdims=True)
    return (x - mean) * jax.lax.rsqrt(var + eps) * w


def ln_qkv_kernel(x_ref, ln1w_ref, wqkv_ref, q_ref, k_ref, v_ref, *, n_heads):
    # x_ref: (1, TT, C) f32; wqkv: (C, 3C) bf16 (Q columns pre-scaled by 1/sqrt(D)).
    # Outputs: q/k/v blocks (1, H, TT, D) bf16 (head-separated layout).
    x = x_ref[0]
    _, C = x.shape
    D = C // n_heads
    xn = _layernorm(x, ln1w_ref[...]).astype(jnp.bfloat16)
    qkv = jnp.dot(xn, wqkv_ref[...], preferred_element_type=jnp.float32)  # (TT, 3C)
    for h in range(n_heads):  # static loop: lane-block slices + lane-dense stores
        q_ref[0, h] = qkv[:, h * D:(h + 1) * D].astype(jnp.bfloat16)
        k_ref[0, h] = qkv[:, C + h * D:C + (h + 1) * D].astype(jnp.bfloat16)
        v_ref[0, h] = qkv[:, 2 * C + h * D:2 * C + (h + 1) * D].astype(jnp.bfloat16)


def attn_mlp_kernel(x_ref, q_ref, k_ref, v_ref, wo_ref, ln2w_ref, w1_ref, w2_ref,
                    o_ref, m_sc, l_sc, acc_sc, *, t_tile):
    # x_ref:  (1, TQ, C) f32 residual query tile (resident across the KV axis)
    # q_ref:  (1, H, TQ, D) bf16 (pre-scaled by 1/sqrt(D))
    # k_ref/v_ref: (1, H, TKV, D) bf16 (one KV block per grid step)
    # wo_ref: (H, D, C) bf16
    # scratch: m/l (H, TQ, 1) f32, acc (H, TQ, D) f32  -> online softmax state
    qi = pl.program_id(1)
    ki = pl.program_id(2)
    nk = pl.num_programs(2)

    @pl.when(ki == 0)
    def _init():
        m_sc[...] = jnp.full(m_sc.shape, -jnp.inf, jnp.float32)
        l_sc[...] = jnp.zeros(l_sc.shape, jnp.float32)
        acc_sc[...] = jnp.zeros(acc_sc.shape, jnp.float32)

    # Skip fully-masked future KV blocks (causal): only ki <= qi contributes.
    @pl.when(ki <= qi)
    def _accumulate():
        q = q_ref[0]                                  # (H, TQ, D)
        k = k_ref[0]                                  # (H, TKV, D)
        v = v_ref[0]
        s = jnp.einsum('hqd,hkd->hqk', q, k,
                       preferred_element_type=jnp.float32)       # (H, TQ, TKV)
        row = qi * t_tile + jax.lax.broadcasted_iota(jnp.int32, (t_tile, t_tile), 0)
        col = ki * t_tile + jax.lax.broadcasted_iota(jnp.int32, (t_tile, t_tile), 1)
        s = jnp.where((col <= row)[None, :, :], s, -1e30)
        m_prev = m_sc[...]
        m_new = jnp.maximum(m_prev, jnp.max(s, axis=-1, keepdims=True))
        alpha = jnp.exp(m_prev - m_new)
        p = jnp.exp(s - m_new)
        l_sc[...] = alpha * l_sc[...] + jnp.sum(p, axis=-1, keepdims=True)
        acc_sc[...] = alpha * acc_sc[...] + jnp.einsum(
            'hqk,hkd->hqd', p.astype(jnp.bfloat16), v,
            preferred_element_type=jnp.float32)
        m_sc[...] = m_new

    @pl.when(ki == nk - 1)
    def _finalize():
        x = x_ref[0]                                  # (TQ, C) f32
        if _APPROX_RECIP:
            inv_l = pl.reciprocal(l_sc[...], approx=True)
        else:
            inv_l = 1.0 / l_sc[...]
        ctx = (acc_sc[...] * inv_l).astype(jnp.bfloat16)          # (H, TQ, D)
        # Head-batched output projection (no concatenate / relayout):
        # attn = sum_h ctx[h] @ wo[h]
        attn = jnp.einsum('hqd,hdc->hqc', ctx, wo_ref[...],
                          preferred_element_type=jnp.float32).sum(axis=0)
        x1 = x + attn

        # ---- LN2 + MLP (SiLU) ------------------------------------------------
        xn2 = _layernorm(x1, ln2w_ref[...]).astype(jnp.bfloat16)
        h1 = jnp.dot(xn2, w1_ref[...], preferred_element_type=jnp.float32)
        h1 = h1 * jax.nn.sigmoid(h1)
        mlp = jnp.dot(h1.astype(jnp.bfloat16), w2_ref[...],
                      preferred_element_type=jnp.float32)
        o_ref[0] = x1 + mlp


def lm_head_kernel(x_ref, lnw_ref, embt_ref, o_ref, xn_sc):
    # x_ref: (1, TT, C) f32 (resident across the vocab axis)
    # embt_ref: (C, TILE_V) bf16 (pre-transposed tied embedding)
    # Final LN computed once per (batch, T-tile) under vi == 0 into bf16 scratch.
    vi = pl.program_id(2)

    @pl.when(vi == 0)
    def _():
        xn_sc[...] = _layernorm(x_ref[0], lnw_ref[...]).astype(jnp.bfloat16)

    o_ref[0] = jnp.dot(xn_sc[...], embt_ref[...],
                       preferred_element_type=jnp.float32)


# ---------------------------------------------------------------------------
# Wrappers
# ---------------------------------------------------------------------------

def _vmem_limit_bytes():
    # Per-generation scoped VMEM limit: physical capacity minus headroom for
    # compiler-internal scratch. Fallback if the query is unavailable.
    try:
        cap = pltpu.get_tpu_info().vmem_capacity_bytes
    except Exception:
        cap = 64 * 1024 * 1024
    return int(max(32 * 1024 * 1024, cap - 16 * 1024 * 1024))


def _cparams(dim_sem):
    return pltpu.CompilerParams(
        dimension_semantics=dim_sem,
        vmem_limit_bytes=_vmem_limit_bytes())


def run_ln_qkv(x, ln1w, wqkv_b, *, n_heads, t_tile):
    B, T, C = x.shape
    D = C // n_heads
    head_shape = jax.ShapeDtypeStruct((B, n_heads, T, D), jnp.bfloat16)
    head_spec = pl.BlockSpec((1, n_heads, t_tile, D), lambda b, t: (b, 0, t, 0))
    kernel = functools.partial(ln_qkv_kernel, n_heads=n_heads)
    return pl.pallas_call(
        kernel,
        out_shape=(head_shape, head_shape, head_shape),
        grid=(B, T // t_tile),
        in_specs=[
            pl.BlockSpec((1, t_tile, C), lambda b, t: (b, t, 0)),
            pl.BlockSpec((1, C), lambda b, t: (0, 0)),
            pl.BlockSpec((C, 3 * C), lambda b, t: (0, 0)),
        ],
        out_specs=(head_spec, head_spec, head_spec),
        compiler_params=_cparams(("parallel", "parallel")),
    )(x, ln1w, wqkv_b)


def run_attn_mlp(x, q, k, v, wo_hdc_b, ln2w, w1_b, w2_b, *, n_heads, t_tile):
    B, T, C = x.shape
    D = C // n_heads
    nq = T // t_tile
    nk = T // t_tile
    kernel = functools.partial(attn_mlp_kernel, t_tile=t_tile)

    # Clamp the KV block index so fully-masked (skipped) blocks re-use the
    # previous block -> no DMA is issued for them.
    def kv_map(b, qi, ki):
        return (b, 0, jnp.minimum(ki, qi), 0)

    return pl.pallas_call(
        kernel,
        out_shape=jax.ShapeDtypeStruct((B, T, C), jnp.float32),
        grid=(B, nq, nk),
        in_specs=[
            pl.BlockSpec((1, t_tile, C), lambda b, qi, ki: (b, qi, 0)),
            pl.BlockSpec((1, n_heads, t_tile, D), lambda b, qi, ki: (b, 0, qi, 0)),
            pl.BlockSpec((1, n_heads, t_tile, D), kv_map),
            pl.BlockSpec((1, n_heads, t_tile, D), kv_map),
            pl.BlockSpec((n_heads, D, C), lambda b, qi, ki: (0, 0, 0)),
            pl.BlockSpec((1, C), lambda b, qi, ki: (0, 0)),
            pl.BlockSpec((C, 4 * C), lambda b, qi, ki: (0, 0)),
            pl.BlockSpec((4 * C, C), lambda b, qi, ki: (0, 0)),
        ],
        out_specs=pl.BlockSpec((1, t_tile, C), lambda b, qi, ki: (b, qi, 0)),
        scratch_shapes=[
            pltpu.VMEM((n_heads, t_tile, 1), jnp.float32),   # m (running max)
            pltpu.VMEM((n_heads, t_tile, 1), jnp.float32),   # l (running denom)
            pltpu.VMEM((n_heads, t_tile, D), jnp.float32),   # acc
        ],
        compiler_params=_cparams(("parallel", "parallel", "arbitrary")),
    )(x, q, k, v, wo_hdc_b, ln2w, w1_b, w2_b)


def run_lm_head(x, lnw, embt_b, *, t_tile, v_tile):
    B, T, C = x.shape
    V = embt_b.shape[1]
    v_tile = min(v_tile, V)
    assert V % v_tile == 0
    return pl.pallas_call(
        lm_head_kernel,
        out_shape=jax.ShapeDtypeStruct((B, T, V), jnp.float32),
        grid=(B, T // t_tile, V // v_tile),
        in_specs=[
            pl.BlockSpec((1, t_tile, C), lambda b, ti, vi: (b, ti, 0)),
            pl.BlockSpec((1, C), lambda b, ti, vi: (0, 0)),
            pl.BlockSpec((C, v_tile), lambda b, ti, vi: (0, vi)),
        ],
        out_specs=pl.BlockSpec((1, t_tile, v_tile), lambda b, ti, vi: (b, ti, vi)),
        scratch_shapes=[pltpu.VMEM((t_tile, C), jnp.bfloat16)],
        compiler_params=_cparams(("parallel", "parallel", "arbitrary")),
    )(x, lnw, embt_b)


def gpt_forward(params, inputs, *, t_tile=128, v_tile=512):
    """inputs: int32 (B, T) token ids. Returns logits (B, T, vocab) f32."""
    B, T = inputs.shape
    t_tile = min(t_tile, T)
    assert T % t_tile == 0
    # Embedding lookups are glue (gather) in plain JAX.
    x = (params["emb"][inputs] + params["pos"][:T][None]).astype(jnp.float32)
    H = params["n_heads"]
    for blk in params["blocks"]:
        q, k, v = run_ln_qkv(x, blk["ln1"], blk["wqkv_b"],
                             n_heads=H, t_tile=t_tile)
        x = run_attn_mlp(x, q, k, v, blk["wo_hdc_b"], blk["ln2"],
                         blk["w1_b"], blk["w2_b"], n_heads=H, t_tile=t_tile)
    # LM head tied to the embedding (logits = ln_f(x) @ emb.T), vocab/T tiled.
    return run_lm_head(x, params["ln_f"], params["emb_t_b"],
                       t_tile=t_tile, v_tile=v_tile)


# ---------------------------------------------------------------------------
# Parameter init / prep
# ---------------------------------------------------------------------------

def init_params(key, vocab_size, max_len, embedding_dim, blocks_num, n_heads):
    C = embedding_dim
    keys = jax.random.split(key, 2 + 6 * blocks_num)
    ki = iter(keys)
    params = {
        "n_heads": n_heads,
        "emb": 0.02 * jax.random.normal(next(ki), (vocab_size, C), jnp.float32),
        "pos": 0.02 * jax.random.normal(next(ki), (max_len, C), jnp.float32),
        "ln_f": jnp.ones((1, C), jnp.float32),
        "blocks": [],
    }
    for _ in range(blocks_num):
        params["blocks"].append({
            "ln1": jnp.ones((1, C), jnp.float32),
            "ln2": jnp.ones((1, C), jnp.float32),
            "wq": 0.02 * jax.random.normal(next(ki), (C, C), jnp.float32),
            "wk": 0.02 * jax.random.normal(next(ki), (C, C), jnp.float32),
            "wv": 0.02 * jax.random.normal(next(ki), (C, C), jnp.float32),
            "wo": 0.02 * jax.random.normal(next(ki), (C, C), jnp.float32),
            "w1": 0.02 * jax.random.normal(next(ki), (C, 4 * C), jnp.float32),
            "w2": 0.02 * jax.random.normal(next(ki), (4 * C, C), jnp.float32),
        })
    return params


def prepare_params(raw):
    """One-time weight prep: pack QKV (fold 1/sqrt(D) into Q), reshape wo to
    (H, D, C), pre-transpose the tied embedding, cast everything to bf16."""
    H = raw["n_heads"]
    C = raw["emb"].shape[1]
    D = C // H
    scale = 1.0 / math.sqrt(D)
    prepped = {
        "n_heads": H,
        "emb": raw["emb"],                                   # f32, for the gather
        "emb_t_b": raw["emb"].T.astype(jnp.bfloat16),        # (C, V) bf16 LM head
        "pos": raw["pos"],
        "ln_f": raw["ln_f"],
        "blocks": [],
    }
    for blk in raw["blocks"]:
        wqkv = jnp.concatenate([blk["wq"] * scale, blk["wk"], blk["wv"]], axis=1)
        prepped["blocks"].append({
            "ln1": blk["ln1"],
            "ln2": blk["ln2"],
            "wqkv_b": wqkv.astype(jnp.bfloat16),
            "wo_hdc_b": blk["wo"].reshape(H, D, C).astype(jnp.bfloat16),
            "w1_b": blk["w1"].astype(jnp.bfloat16),
            "w2_b": blk["w2"].astype(jnp.bfloat16),
        })
    return prepped


# ---------------------------------------------------------------------------
# Pure-JAX reference (f32, for correctness check)
# ---------------------------------------------------------------------------

def _ref_ln(x, w, eps=1e-5):
    mean = jnp.mean(x, axis=-1, keepdims=True)
    var = jnp.mean((x - mean) ** 2, axis=-1, keepdims=True)
    return (x - mean) / jnp.sqrt(var + eps) * w


def ref_forward(params, inputs):
    B, T = inputs.shape
    x = params["emb"][inputs] + params["pos"][:T][None]
    H = params["n_heads"]
    for blk in params["blocks"]:
        C = x.shape[-1]
        D = C // H
        xn = _ref_ln(x, blk["ln1"].reshape(-1))
        q = (xn @ blk["wq"]).reshape(B, T, H, D).transpose(0, 2, 1, 3)
        k = (xn @ blk["wk"]).reshape(B, T, H, D).transpose(0, 2, 1, 3)
        v = (xn @ blk["wv"]).reshape(B, T, H, D).transpose(0, 2, 1, 3)
        s = jnp.einsum("bhqd,bhkd->bhqk", q, k) / math.sqrt(D)
        mask = jnp.tril(jnp.ones((T, T), bool))
        s = jnp.where(mask, s, -jnp.inf)
        p = jax.nn.softmax(s, axis=-1)
        y = jnp.einsum("bhqk,bhkd->bhqd", p, v).transpose(0, 2, 1, 3).reshape(B, T, C)
        x = x + y @ blk["wo"]
        xn2 = _ref_ln(x, blk["ln2"].reshape(-1))
        h1 = xn2 @ blk["w1"]
        x = x + (h1 * jax.nn.sigmoid(h1)) @ blk["w2"]
    x = _ref_ln(x, params["ln_f"].reshape(-1))
    return x @ params["emb"].T


# ---------------------------------------------------------------------------
# Main
# ---------------------------------------------------------------------------

if __name__ == "__main__":
    # Lane-dense small config: C, V multiples of 128; D = C/H = 128.
    vocab_size, max_len, embedding_dim, blocks_num, n_heads = 512, 128, 256, 2, 2
    B, T = 2, 128
    T_TILE, V_TILE = 128, 512

    key = jax.random.PRNGKey(0)
    pkey, ikey = jax.random.split(key)
    raw_params = init_params(pkey, vocab_size, max_len, embedding_dim,
                             blocks_num, n_heads)
    params = prepare_params(raw_params)
    inputs = jax.random.randint(ikey, (B, T), 0, vocab_size, dtype=jnp.int32)

    logits = gpt_forward(params, inputs, t_tile=T_TILE, v_tile=V_TILE)
    logits = jax.block_until_ready(logits)

    ref = ref_forward(raw_params, inputs)
    assert logits.shape == (B, T, vocab_size)
    max_err = float(jnp.max(jnp.abs(logits - ref)))
    # bf16 matmuls + approx reciprocal => loosened tolerance vs the f32 reference.
    assert jnp.allclose(logits, ref, rtol=5e-2, atol=5e-2), max_err

    print("KERNEL_OK")
</pallas_src>

<mosaic_0001>
module attributes {stable_mosaic.version = 11 : i64} {
  func.func @ln_qkv_kernel(%arg0: i32, %arg1: i32, %arg2: memref<1x128x256xf32, #tpu.memory_space<vmem>>, %arg3: memref<1x256xf32, #tpu.memory_space<vmem>>, %arg4: memref<256x768xbf16, #tpu.memory_space<vmem>>, %arg5: memref<1x2x128x128xbf16, #tpu.memory_space<vmem>>, %arg6: memref<1x2x128x128xbf16, #tpu.memory_space<vmem>>, %arg7: memref<1x2x128x128xbf16, #tpu.memory_space<vmem>>) attributes {dimension_semantics = [#tpu.dimension_semantics<parallel>, #tpu.dimension_semantics<parallel>], iteration_bounds = array<i64: 2, 1>, scalar_prefetch = 0 : i64, scratch_operands = 0 : i64, tpu.core_type = #tpu.core_type<tc>, window_params = [{transform_indices = @transform_0, window_bounds = array<i64: 1, 128, 256>}, {pipeline_mode = #tpu.pipeline_mode<synchronous>, transform_indices = @transform_1, window_bounds = array<i64: 1, 256>}, {pipeline_mode = #tpu.pipeline_mode<synchronous>, transform_indices = @transform_2, window_bounds = array<i64: 256, 768>}, {transform_indices = @transform_3, window_bounds = array<i64: 1, 2, 128, 128>}, {transform_indices = @transform_4, window_bounds = array<i64: 1, 2, 128, 128>}, {transform_indices = @transform_5, window_bounds = array<i64: 1, 2, 128, 128>}]} {
    %c0 = arith.constant 0 : index
    %c0_0 = arith.constant 0 : index
    %c0_1 = arith.constant 0 : index
    %0 = vector.load %arg2[%c0, %c0_0, %c0_1] : memref<1x128x256xf32, #tpu.memory_space<vmem>>, vector<1x128x256xf32>
    %1 = vector.shape_cast %0 : vector<1x128x256xf32> to vector<128x256xf32>
    %c0_2 = arith.constant 0 : index
    %c0_3 = arith.constant 0 : index
    %2 = vector.load %arg3[%c0_2, %c0_3] : memref<1x256xf32, #tpu.memory_space<vmem>>, vector<1x256xf32>
    %cst = arith.constant dense<0.000000e+00> : vector<128xf32>
    %3 = vector.multi_reduction <add>, %1, %cst [1] : vector<128x256xf32> to vector<128xf32>
    %4 = vector.shape_cast %3 : vector<128xf32> to vector<128x1xf32>
    %cst_4 = arith.constant 2.560000e+02 : f32
    %5 = vector.broadcast %cst_4 : f32 to vector<128x1xf32>
    %6 = arith.divf %4, %5 : vector<128x1xf32>
    %7 = vector.broadcast %6 : vector<128x1xf32> to vector<128x256xf32>
    %8 = arith.subf %1, %7 : vector<128x256xf32>
    %9 = arith.mulf %8, %8 : vector<128x256xf32>
    %cst_5 = arith.constant dense<0.000000e+00> : vector<128xf32>
    %10 = vector.multi_reduction <add>, %9, %cst_5 [1] : vector<128x256xf32> to vector<128xf32>
    %11 = vector.shape_cast %10 : vector<128xf32> to vector<128x1xf32>
    %cst_6 = arith.constant 2.560000e+02 : f32
    %12 = vector.broadcast %cst_6 : f32 to vector<128x1xf32>
    %13 = arith.divf %11, %12 : vector<128x1xf32>
    %14 = vector.broadcast %6 : vector<128x1xf32> to vector<128x256xf32>
    %15 = arith.subf %1, %14 : vector<128x256xf32>
    %cst_7 = arith.constant 9.99999974E-6 : f32
    %16 = vector.broadcast %cst_7 : f32 to vector<128x1xf32>
    %17 = arith.addf %13, %16 : vector<128x1xf32>
    %18 = math.rsqrt %17 : vector<128x1xf32>
    %19 = vector.broadcast %18 : vector<128x1xf32> to vector<128x256xf32>
    %20 = arith.mulf %15, %19 : vector<128x256xf32>
    %21 = vector.broadcast %2 : vector<1x256xf32> to vector<128x256xf32>
    %22 = arith.mulf %20, %21 : vector<128x256xf32>
    %23 = arith.truncf %22 : vector<128x256xf32> to vector<128x256xbf16>
    %c0_8 = arith.constant 0 : index
    %c0_9 = arith.constant 0 : index
    %24 = vector.load %arg4[%c0_8, %c0_9] : memref<256x768xbf16, #tpu.memory_space<vmem>>, vector<256x768xbf16>
    %cst_10 = arith.constant dense<0.000000e+00> : vector<128x768xf32>
    %25 = tpu.matmul %23, %24, %cst_10 {dimension_numbers = #tpu.dot_dimension_numbers<[1], [0], [0], [1], [0, 0, 1, 1], [], []>} : vector<128x256xbf16>, vector<256x768xbf16>, vector<128x768xf32> -> vector<128x768xf32>
    %26 = vector.extract_strided_slice %25 {offsets = [0, 0], sizes = [128, 128], strides = [1, 1]} : vector<128x768xf32> to vector<128x128xf32>
    %27 = arith.truncf %26 : vector<128x128xf32> to vector<128x128xbf16>
    %c0_11 = arith.constant 0 : index
    %c0_12 = arith.constant 0 : index
    %c0_13 = arith.constant 0 : index
    %c0_14 = arith.constant 0 : index
    %28 = vector.load %arg5[%c0_11, %c0_12, %c0_13, %c0_14] : memref<1x2x128x128xbf16, #tpu.memory_space<vmem>>, vector<1x1x128x128xbf16>
    %29 = vector.shape_cast %28 : vector<1x1x128x128xbf16> to vector<128x128xbf16>
    %30 = vector.shape_cast %27 : vector<128x128xbf16> to vector<1x1x128x128xbf16>
    tpu.vector_store %arg5[%c0_11, %c0_12, %c0_13, %c0_14], %30 {strides = array<i32>} : memref<1x2x128x128xbf16, #tpu.memory_space<vmem>>, vector<1x1x128x128xbf16>,
    %31 = vector.extract_strided_slice %25 {offsets = [0, 256], sizes = [128, 128], strides = [1, 1]} : vector<128x768xf32> to vector<128x128xf32>
    %32 = arith.truncf %31 : vector<128x128xf32> to vector<128x128xbf16>
    %c0_15 = arith.constant 0 : index
    %c0_16 = arith.constant 0 : index
    %c0_17 = arith.constant 0 : index
    %c0_18 = arith.constant 0 : index
    %33 = vector.load %arg6[%c0_15, %c0_16, %c0_17, %c0_18] : memref<1x2x128x128xbf16, #tpu.memory_space<vmem>>, vector<1x1x128x128xbf16>
    %34 = vector.shape_cast %33 : vector<1x1x128x128xbf16> to vector<128x128xbf16>
    %35 = vector.shape_cast %32 : vector<128x128xbf16> to vector<1x1x128x128xbf16>
    tpu.vector_store %arg6[%c0_15, %c0_16, %c0_17, %c0_18], %35 {strides = array<i32>} : memref<1x2x128x128xbf16, #tpu.memory_space<vmem>>, vector<1x1x128x128xbf16>,
    %36 = vector.extract_strided_slice %25 {offsets = [0, 512], sizes = [128, 128], strides = [1, 1]} : vector<128x768xf32> to vector<128x128xf32>
    %37 = arith.truncf %36 : vector<128x128xf32> to vector<128x128xbf16>
    %c0_19 = arith.constant 0 : index
    %c0_20 = arith.constant 0 : index
    %c0_21 = arith.constant 0 : index
    %c0_22 = arith.constant 0 : index
    %38 = vector.load %arg7[%c0_19, %c0_20, %c0_21, %c0_22] : memref<1x2x128x128xbf16, #tpu.memory_space<vmem>>, vector<1x1x128x128xbf16>
    %39 = vector.shape_cast %38 : vector<1x1x128x128xbf16> to vector<128x128xbf16>
    %40 = vector.shape_cast %37 : vector<128x128xbf16> to vector<1x1x128x128xbf16>
    tpu.vector_store %arg7[%c0_19, %c0_20, %c0_21, %c0_22], %40 {strides = array<i32>} : memref<1x2x128x128xbf16, #tpu.memory_space<vmem>>, vector<1x1x128x128xbf16>,
    %41 = vector.extract_strided_slice %25 {offsets = [0, 128], sizes = [128, 128], strides = [1, 1]} : vector<128x768xf32> to vector<128x128xf32>
    %42 = arith.truncf %41 : vector<128x128xf32> to vector<128x128xbf16>
    %c0_23 = arith.constant 0 : index
    %c1 = arith.constant 1 : index
    %c0_24 = arith.constant 0 : index
    %c0_25 = arith.constant 0 : index
    %43 = vector.load %arg5[%c0_23, %c1, %c0_24, %c0_25] : memref<1x2x128x128xbf16, #tpu.memory_space<vmem>>, vector<1x1x128x128xbf16>
    %44 = vector.shape_cast %43 : vector<1x1x128x128xbf16> to vector<128x128xbf16>
    %45 = vector.shape_cast %42 : vector<128x128xbf16> to vector<1x1x128x128xbf16>
    tpu.vector_store %arg5[%c0_23, %c1, %c0_24, %c0_25], %45 {strides = array<i32>} : memref<1x2x128x128xbf16, #tpu.memory_space<vmem>>, vector<1x1x128x128xbf16>,
    %46 = vector.extract_strided_slice %25 {offsets = [0, 384], sizes = [128, 128], strides = [1, 1]} : vector<128x768xf32> to vector<128x128xf32>
    %47 = arith.truncf %46 : vector<128x128xf32> to vector<128x128xbf16>
    %c0_26 = arith.constant 0 : index
    %c1_27 = arith.constant 1 : index
    %c0_28 = arith.constant 0 : index
    %c0_29 = arith.constant 0 : index
    %48 = vector.load %arg6[%c0_26, %c1_27, %c0_28, %c0_29] : memref<1x2x128x128xbf16, #tpu.memory_space<vmem>>, vector<1x1x128x128xbf16>
    %49 = vector.shape_cast %48 : vector<1x1x128x128xbf16> to vector<128x128xbf16>
    %50 = vector.shape_cast %47 : vector<128x128xbf16> to vector<1x1x128x128xbf16>
    tpu.vector_store %arg6[%c0_26, %c1_27, %c0_28, %c0_29], %50 {strides = array<i32>} : memref<1x2x128x128xbf16, #tpu.memory_space<vmem>>, vector<1x1x128x128xbf16>,
    %51 = vector.extract_strided_slice %25 {offsets = [0, 640], sizes = [128, 128], strides = [1, 1]} : vector<128x768xf32> to vector<128x128xf32>
    %52 = arith.truncf %51 : vector<128x128xf32> to vector<128x128xbf16>
    %c0_30 = arith.constant 0 : index
    %c1_31 = arith.constant 1 : index
    %c0_32 = arith.constant 0 : index
    %c0_33 = arith.constant 0 : index
    %53 = vector.load %arg7[%c0_30, %c1_31, %c0_32, %c0_33] : memref<1x2x128x128xbf16, #tpu.memory_space<vmem>>, vector<1x1x128x128xbf16>
    %54 = vector.shape_cast %53 : vector<1x1x128x128xbf16> to vector<128x128xbf16>
    %55 = vector.shape_cast %52 : vector<128x128xbf16> to vector<1x1x128x128xbf16>
    tpu.vector_store %arg7[%c0_30, %c1_31, %c0_32, %c0_33], %55 {strides = array<i32>} : memref<1x2x128x128xbf16, #tpu.memory_space<vmem>>, vector<1x1x128x128xbf16>,
    return
  }
  func.func @transform_0(%arg0: i32, %arg1: i32) -> (i32, i32, i32) {
    %c0_i32 = arith.constant 0 : i32
    %c0_i32_0 = arith.constant 0 : i32
    return %arg0, %arg1, %c0_i32 : i32, i32, i32
  }
  func.func @transform_1(%arg0: i32, %arg1: i32) -> (i32, i32) {
    %c0_i32 = arith.constant 0 : i32
    %c0_i32_0 = arith.constant 0 : i32
    %c0_i32_1 = arith.constant 0 : i32
    return %c0_i32, %c0_i32_0 : i32, i32
  }
  func.func @transform_2(%arg0: i32, %arg1: i32) -> (i32, i32) {
    %c0_i32 = arith.constant 0 : i32
    %c0_i32_0 = arith.constant 0 : i32
    %c0_i32_1 = arith.constant 0 : i32
    return %c0_i32, %c0_i32_0 : i32, i32
  }
  func.func @transform_3(%arg0: i32, %arg1: i32) -> (i32, i32, i32, i32) {
    %c0_i32 = arith.constant 0 : i32
    %c0_i32_0 = arith.constant 0 : i32
    %c0_i32_1 = arith.constant 0 : i32
    return %arg0, %c0_i32, %arg1, %c0_i32_0 : i32, i32, i32, i32
  }
  func.func @transform_4(%arg0: i32, %arg1: i32) -> (i32, i32, i32, i32) {
    %c0_i32 = arith.constant 0 : i32
    %c0_i32_0 = arith.constant 0 : i32
    %c0_i32_1 = arith.constant 0 : i32
    return %arg0, %c0_i32, %arg1, %c0_i32_0 : i32, i32, i32, i32
  }
  func.func @transform_5(%arg0: i32, %arg1: i32) -> (i32, i32, i32, i32) {
    %c0_i32 = arith.constant 0 : i32
    %c0_i32_0 = arith.constant 0 : i32
    %c0_i32_1 = arith.constant 0 : i32
    return %arg0, %c0_i32, %arg1, %c0_i32_0 : i32, i32, i32, i32
  }
}

</mosaic_0001>

<llo_original>
// kernel: tpu_custom_call.1
$region0: #{tpu_custom_call.1}
  #allocation0 [shape = 'u32[]', space=smem, size = 0x4, offset = 0x4, fixed_abs, tag = 'smem constant byte address 0x4 - core index']
  #allocation1 [shape = 'u32[72,128]{1,0:T(1,128)}', space=vmem, size = 0x9000, scoped, tag = 'internal scratch']
  %s0 = inlined_call_operand.hbm [shape: f32[2,128,256], index: 0, kind: input, shape index: {}]
  %s1 = inlined_call_operand.hbm [shape: f32[1,256], index: 1, kind: input, shape index: {}]
  %s2 = inlined_call_operand.hbm [shape: bf16[256,768], index: 2, kind: input, shape index: {}]
  %s3 = inlined_call_operand.hbm [shape: bf16[2,2,128,128], index: 3, kind: output, shape index: {0}]
  %s4 = inlined_call_operand.hbm [shape: bf16[2,2,128,128], index: 4, kind: output, shape index: {1}]
  %s5 = inlined_call_operand.hbm [shape: bf16[2,2,128,128], index: 5, kind: output, shape index: {2}]
  %6 = xla_tuple %s3, %s4, %s5
  %s7 = sld [smem:[#allocation0]]
  $region73: #{tpu_custom_call.1} parent=0
    _
  %s9 = ssub.s32 1, %s7
  %s10 = scalar_select 0, %s9, %s7
  $region1: #{tpu_custom_call.1} parent=0
    #allocation2 [shape = 'u8[262144]{0}', space=vmem, size = 0x40000, scoped, tag = 'input window, operand 0']
    #allocation3 [shape = 's32[2]{0}', space=sflag, size = 0x8, scoped, tag = 'scoped memory for tpu_custom_call.1']
    #allocation4 [shape = 's32[2]{0}', space=sflag, size = 0x8, scoped, tag = 'scoped memory for tpu_custom_call.1']
    #allocation5 [shape = 'u8[1024]{0}', space=vmem, size = 0x400, scoped, tag = 'input window, operand 1, single buffered']
    #allocation6 [shape = 's32[1]{0}', space=sflag, size = 0x4, scoped, tag = 'scoped memory for tpu_custom_call.1']
    #allocation7 [shape = 'u8[393216]{0}', space=vmem, size = 0x60000, scoped, tag = 'input window, operand 2, single buffered']
    #allocation8 [shape = 'u8[131072]{0}', space=vmem, size = 0x20000, scoped, tag = 'output window, operand 0']
    #allocation9 [shape = 'u8[131072]{0}', space=vmem, size = 0x20000, scoped, tag = 'output window, operand 1']
    #allocation10 [shape = 's32[2]{0}', space=sflag, size = 0x8, scoped, tag = 'scoped memory for tpu_custom_call.1']
    #allocation11 [shape = 'u8[131072]{0}', space=vmem, size = 0x20000, scoped, tag = 'output window, operand 2']
    %11 = vsyncpa [#allocation3], 0
    %s12 = scalar_lea.sflag [#allocation3], 1
    %13 = vsyncpa %s12, 0
    %14 = vsyncpa [#allocation6], 0
    %15 = vsyncpa [#allocation4], 0
    %s16 = scalar_lea.sflag [#allocation4], 1
    %17 = vsyncpa %s16, 0
    %18 = vsyncpa [#allocation10], 0
    %s19 = scalar_lea.sflag [#allocation10], 1
    %20 = vsyncpa %s19, 0
    loop: start=0, step=1, limit=4
    $region2: #{tpu_custom_call.1} parent=1 // loop_pre_header
      _
    $region3: #{tpu_custom_call.1} parent=1 // loop_header
      %s22 = sphi 0, %s26
      %p23 = scmp.ge.s32.totalorder %s22, 4
      %s29 = sphi 0, %s41
      %s30 = sphi 0, %s37
      %s31 = sphi 0, %s29
      %s32 = sphi 0, %s30
      %s33 = sphi 0, %s31
      %s34 = sphi 0, %s32
      %s46 = sphi 0, %s48
      %s49 = sphi 0, %s46
      %s50 = sphi 0, %s49
      %s66 = sphi 0, %s50
      %s70 = sphi 0, %s70
      %s72 = sphi 0, %s70
      %s73 = sphi 0, %s72
      %s87 = sphi 0, %s73
      %s91 = sphi 0, %s91
      %s93 = sphi 0, %s91
      %s94 = sphi 0, %s93
      %s108 = sphi 0, %s94
      %s116 = sphi 0, %s118
      %s119 = sphi 0, %s116
      %s120 = sphi 0, %s119
      %s136 = sphi 0, %s120
      %s144 = sphi 0, %s146
      %s147 = sphi 0, %s144
      %s148 = sphi 0, %s147
      %s164 = sphi 0, %s148
      %s172 = sphi 0, %s174
      %s175 = sphi 0, %s172
      %s176 = sphi 0, %s175
      %s192 = sphi 0, %s176
    $region4: #{tpu_custom_call.1} parent=1 // loop_header_branch
      %25 = sbr.rel (%p23) target = $region8
    $region5: #{tpu_custom_call.1} parent=1 // loop_body
      %s27 = ssub.s32 %s22, 1
      %s28 = ssub.s32 %s22, 2
      %s35 = sadd.s32 1, %s30
      %p36 = scmp.ge.s32.totalorder %s35, 1
      %s37 = scalar_select %p36, 0, %s35
      %s38 = sadd.s32 1, %s29
      %s39 = scalar_select %p36, %s38, %s29
      %p40 = scmp.ge.s32.totalorder %s39, 2
      %s41 = scalar_select %p40, 0, %s39
      %s42 = ssub.s32 %s29, %s41
      %s43 = ssub.s32 %s30, %s37
      %s44 = sor.u32 %s42, %s43
      %p45 = scmp.eq.s32.totalorder %s44, 0
      %s47 = sadd.s32 %s46, 1
      %s48 = scalar_select %p45, %s46, %s47
      %p51 = pneg %p45
      %p52 = scmp.eq.s32.totalorder %s22, 1
      %p53 = por %p51, %p52
      %p54 = scmp.ne.s32.totalorder %s46, %s49
      %p55 = scmp.eq.s32.totalorder %s22, 0
      %p56 = por %p54, %p55
      %p57 = scmp.ne.s32.totalorder %s46, %s49
      %p58 = scmp.eq.s32.totalorder %s27, 1
      %p59 = por %p57, %p58
      %p60 = scmp.ne.s32.totalorder %s49, %s50
      %p61 = scmp.eq.s32.totalorder %s27, 0
      %p62 = por %p60, %p61
      %p63 = scmp.ne.s32.totalorder %s49, %s50
      %p64 = scmp.eq.s32.totalorder %s28, 1
      %p65 = por %p63, %p64
      %p67 = scmp.ne.s32.totalorder %s50, %s66
      %p68 = scmp.eq.s32.totalorder %s28, 0
      %p69 = por %p67, %p68
      %s71 = sadd.s32 %s70, 1
      %p74 = scmp.eq.s32.totalorder %s22, 1
      %p75 = scmp.ne.s32.totalorder %s70, %s72
      %p76 = scmp.eq.s32.totalorder %s22, 0
      %p77 = por %p75, %p76
      %p78 = scmp.ne.s32.totalorder %s70, %s72
      %p79 = scmp.eq.s32.totalorder %s27, 1
      %p80 = por %p78, %p79
      %p81 = scmp.ne.s32.totalorder %s72, %s73
      %p82 = scmp.eq.s32.totalorder %s27, 0
      %p83 = por %p81, %p82
      %p84 = scmp.ne.s32.totalorder %s72, %s73
      %p85 = scmp.eq.s32.totalorder %s28, 1
      %p86 = por %p84, %p85
      %p88 = scmp.ne.s32.totalorder %s73, %s87
      %p89 = scmp.eq.s32.totalorder %s28, 0
      %p90 = por %p88, %p89
      %s92 = sadd.s32 %s91, 1
      %p95 = scmp.eq.s32.totalorder %s22, 1
      %p96 = scmp.ne.s32.totalorder %s91, %s93
      %p97 = scmp.eq.s32.totalorder %s22, 0
      %p98 = por %p96, %p97
      %p99 = scmp.ne.s32.totalorder %s91, %s93
      %p100 = scmp.eq.s32.totalorder %s27, 1
      %p101 = por %p99, %p100
      %p102 = scmp.ne.s32.totalorder %s93, %s94
      %p103 = scmp.eq.s32.totalorder %s27, 0
      %p104 = por %p102, %p103
      %p105 = scmp.ne.s32.totalorder %s93, %s94
      %p106 = scmp.eq.s32.totalorder %s28, 1
      %p107 = por %p105, %p106
      %p109 = scmp.ne.s32.totalorder %s94, %s108
      %p110 = scmp.eq.s32.totalorder %s28, 0
      %p111 = por %p109, %p110
      %s112 = ssub.s32 %s29, %s41
      %s113 = ssub.s32 %s30, %s37
      %s114 = sor.u32 %s112, %s113
      %p115 = scmp.eq.s32.totalorder %s114, 0
      %s117 = sadd.s32 %s116, 1
      %s118 = scalar_select %p115, %s116, %s117
      %p121 = pneg %p115
      %p122 = scmp.eq.s32.totalorder %s22, 1
      %p123 = por %p121, %p122
      %p124 = scmp.ne.s32.totalorder %s116, %s119
      %p125 = scmp.eq.s32.totalorder %s22, 0
      %p126 = por %p124, %p125
      %p127 = scmp.ne.s32.totalorder %s116, %s119
      %p128 = scmp.eq.s32.totalorder %s27, 1
      %p129 = por %p127, %p128
      %p130 = scmp.ne.s32.totalorder %s119, %s120
      %p131 = scmp.eq.s32.totalorder %s27, 0
      %p132 = por %p130, %p131
      %p133 = scmp.ne.s32.totalorder %s119, %s120
      %p134 = scmp.eq.s32.totalorder %s28, 1
      %p135 = por %p133, %p134
      %p137 = scmp.ne.s32.totalorder %s120, %s136
      %p138 = scmp.eq.s32.totalorder %s28, 0
      %p139 = por %p137, %p138
      %s140 = ssub.s32 %s29, %s41
      %s141 = ssub.s32 %s30, %s37
      %s142 = sor.u32 %s140, %s141
      %p143 = scmp.eq.s32.totalorder %s142, 0
      %s145 = sadd.s32 %s144, 1
      %s146 = scalar_select %p143, %s144, %s145
      %p149 = pneg %p143
      %p150 = scmp.eq.s32.totalorder %s22, 1
      %p151 = por %p149, %p150
      %p152 = scmp.ne.s32.totalorder %s144, %s147
      %p153 = scmp.eq.s32.totalorder %s22, 0
      %p154 = por %p152, %p153
      %p155 = scmp.ne.s32.totalorder %s144, %s147
      %p156 = scmp.eq.s32.totalorder %s27, 1
      %p157 = por %p155, %p156
      %p158 = scmp.ne.s32.totalorder %s147, %s148
      %p159 = scmp.eq.s32.totalorder %s27, 0
      %p160 = por %p158, %p159
      %p161 = scmp.ne.s32.totalorder %s147, %s148
      %p162 = scmp.eq.s32.totalorder %s28, 1
      %p163 = por %p161, %p162
      %p165 = scmp.ne.s32.totalorder %s148, %s164
      %p166 = scmp.eq.s32.totalorder %s28, 0
      %p167 = por %p165, %p166
      %s168 = ssub.s32 %s29, %s41
      %s169 = ssub.s32 %s30, %s37
      %s170 = sor.u32 %s168, %s169
      %p171 = scmp.eq.s32.totalorder %s170, 0
      %s173 = sadd.s32 %s172, 1
      %s174 = scalar_select %p171, %s172, %s173
      %p177 = pneg %p171
      %p178 = scmp.eq.s32.totalorder %s22, 1
      %p179 = por %p177, %p178
      %p180 = scmp.ne.s32.totalorder %s172, %s175
      %p181 = scmp.eq.s32.totalorder %s22, 0
      %p182 = por %p180, %p181
      %p183 = scmp.ne.s32.totalorder %s172, %s175
      %p184 = scmp.eq.s32.totalorder %s27, 1
      %p185 = por %p183, %p184
      %p186 = scmp.ne.s32.totalorder %s175, %s176
      %p187 = scmp.eq.s32.totalorder %s27, 0
      %p188 = por %p186, %p187
      %p189 = scmp.ne.s32.totalorder %s175, %s176
      %p190 = scmp.eq.s32.totalorder %s28, 1
      %p191 = por %p189, %p190
      %p193 = scmp.ne.s32.totalorder %s176, %s192
      %p194 = scmp.eq.s32.totalorder %s28, 0
      %p195 = por %p193, %p194
      %p196 = scmp.le.s32.totalorder 1, %s22
      %p197 = scmp.lt.s32.totalorder %s22, 3
      %p198 = pnand %p196, %p197
      %p199 = pneg %p198
      // Predicated region
      $region9: #{tpu_custom_call.1} parent=5 // pred_check
        _
      $region10: #{tpu_custom_call.1} parent=5 // pred_check_branch
        %201 = sbr.rel (%p198) target = $region12
      $region11: #{tpu_custom_call.1} parent=5 // pred_region
        %s202 = ssub.s32 %s22, 1
        // Predicated region
        $region13: #{tpu_custom_call.1} parent=11 // pred_check
          %p203 = pneg %p83
        $region14: #{tpu_custom_call.1} parent=11 // pred_check_branch
          %205 = sbr.rel (%p203) target = $region16
        $region15: #{tpu_custom_call.1} parent=11 // pred_region
          %207 = vsyncadd [#allocation6], 0
          %s209 = sshll.u32 %s1, 4
          %s210 = int_to_ptr.hbm [resolvable:$true] %s209
          %s211 = sshll.u32 [#allocation5], 4
          %s212 = int_to_ptr.vmem [resolvable:$true] %s211
          %214 = dma.hbm_to_vmem [thread:$0]  %s210, 32, %s212, [#allocation6]
        $region16: #{tpu_custom_call.1} parent=11 // pred_fallthru
          _
        // Predicated region
        $region17: #{tpu_custom_call.1} parent=11 // pred_check
          %p215 = pneg %p104
        $region18: #{tpu_custom_call.1} parent=11 // pred_check_branch
          %217 = sbr.rel (%p215) target = $region20
        $region19: #{tpu_custom_call.1} parent=11 // pred_region
          %219 = vsyncadd [#allocation6], 0
          %s220 = sshll.u32 %s2, 4
          %s221 = int_to_ptr.hbm [resolvable:$true] %s220
          %s222 = sshll.u32 [#allocation7], 4
          %s223 = int_to_ptr.vmem [resolvable:$true] %s222
          %228 = dma.hbm_to_vmem [thread:$0]  %s221, 12288, %s223, [#allocation6], 384, 384, 24
        $region20: #{tpu_custom_call.1} parent=11 // pred_fallthru
          _
      $region12: #{tpu_custom_call.1} parent=5 // pred_fallthru
        _
      %p229 = scmp.lt.s32.totalorder %s22, 2
      // Predicated region
      $region21: #{tpu_custom_call.1} parent=5 // pred_check
        %p230 = pneg %p229
      $region22: #{tpu_custom_call.1} parent=5 // pred_check_branch
        %232 = sbr.rel (%p230) target = $region24
      $region23: #{tpu_custom_call.1} parent=5 // pred_region
        // Predicated region
        $region25: #{tpu_custom_call.1} parent=23 // pred_check
          %p233 = pneg %p56
        $region26: #{tpu_custom_call.1} parent=23 // pred_check_branch
          %235 = sbr.rel (%p233) target = $region28
        $region27: #{tpu_custom_call.1} parent=23 // pred_region
          %s236 = sand.u32 %s46, 1
          %s237 = scalar_lea.sflag [#allocation3], %s236
          %s238 = sand.u32 %s46, 1
          %s239 = smul.addr %s238, 256
          %s240 = scalar_lea.vmem [#allocation2], %s239
          %s241 = smul.u32 16, %s30
          %243 = vsyncadd %s237, 0
          %s244 = smul.addr %s241, 2
          %s245 = smul.addr %s29, 32
          %s246 = sadd.s32 %s244, %s245
          %s247 = smul.addr %s246, 8
          %s248 = scalar_lea.hbm %s0, %s247
          %s249 = sshll.u32 %s248, 4
          %s250 = int_to_ptr.hbm [resolvable:$true] %s249
          %s251 = sshll.u32 %s240, 4
          %s252 = int_to_ptr.vmem [resolvable:$true] %s251
          %257 = dma.hbm_to_vmem [thread:$0]  %s250, 4096, %s252, %s237, 256, 256, 16
        $region28: #{tpu_custom_call.1} parent=23 // pred_fallthru
          _
      $region24: #{tpu_custom_call.1} parent=5 // pred_fallthru
        _
      %p258 = scmp.le.s32.totalorder 1, %s22
      %p259 = scmp.lt.s32.totalorder %s22, 3
      %p260 = pnand %p258, %p259
      %p261 = pneg %p260
      // Predicated region
      $region29: #{tpu_custom_call.1} parent=5 // pred_check
        _
      $region30: #{tpu_custom_call.1} parent=5 // pred_check_branch
        %263 = sbr.rel (%p260) target = $region32
      $region31: #{tpu_custom_call.1} parent=5 // pred_region
        %s264 = ssub.s32 %s22, 1
        %s265 = sand.u32 %s49, 1
        %s266 = scalar_lea.sflag [#allocation3], %s265
        %s267 = sand.u32 %s49, 1
        %s268 = smul.addr %s267, 256
        %s269 = scalar_lea.vmem [#allocation2], %s268
        // Predicated region
        $region33: #{tpu_custom_call.1} parent=31 // pred_check
          %p270 = pneg %p62
        $region34: #{tpu_custom_call.1} parent=31 // pred_check_branch
          %272 = sbr.rel (%p270) target = $region36
        $region35: #{tpu_custom_call.1} parent=31 // pred_region
          %274 = dma.done %s266, 4096
        $region36: #{tpu_custom_call.1} parent=31 // pred_fallthru
          _
        // Predicated region
        $region37: #{tpu_custom_call.1} parent=31 // pred_check
          %p275 = pneg %p83
        $region38: #{tpu_custom_call.1} parent=31 // pred_check_branch
          %277 = sbr.rel (%p275) target = $region40
        $region39: #{tpu_custom_call.1} parent=31 // pred_region
          %279 = dma.done [#allocation6], 32
        $region40: #{tpu_custom_call.1} parent=31 // pred_fallthru
          _
        // Predicated region
        $region41: #{tpu_custom_call.1} parent=31 // pred_check
          %p280 = pneg %p104
        $region42: #{tpu_custom_call.1} parent=31 // pred_check_branch
          %282 = sbr.rel (%p280) target = $region44
        $region43: #{tpu_custom_call.1} parent=31 // pred_region
          %284 = dma.done [#allocation6], 12288
        $region44: #{tpu_custom_call.1} parent=31 // pred_fallthru
          _
        %s285 = sand.u32 %s49, 1
        %s286 = scalar_lea.sflag [#allocation3], %s285
        %s287 = sand.u32 %s49, 1
        %s288 = smul.addr %s287, 256
        %s289 = scalar_lea.vmem [#allocation2], %s288
        %p290 = pneg %p62
        %p291 = pneg %p59
        %p292 = pneg %p83
        %p293 = pneg %p80
        %p294 = pneg %p104
        %p295 = pneg %p101
        %p296 = pneg %p132
        %p297 = pneg %p129
        %s298 = sand.u32 %s119, 1
        %s299 = scalar_lea.sflag [#allocation4], %s298
        %s300 = sand.u32 %s119, 1
        %s301 = smul.addr %s300, 128
        %s302 = scalar_lea.vmem [#allocation8], %s301
        %p303 = pneg %p160
        %p304 = pneg %p157
        %s305 = sand.u32 %s27, 1
        %s306 = scalar_lea.sflag [#allocation10], %s305
        %s307 = sand.u32 %s147, 1
        %s308 = smul.addr %s307, 128
        %s309 = scalar_lea.vmem [#allocation9], %s308
        %p310 = pneg %p188
        %p311 = pneg %p185
        %s312 = sand.u32 %s27, 1
        %s313 = scalar_lea.sflag [#allocation10], %s312
        %s314 = sand.u32 %s175, 1
        %s315 = smul.addr %s314, 128
        %s316 = scalar_lea.vmem [#allocation11], %s315
        %s317 = smul.u32 16, %s32
        %s318 = smul.u32 16, %s32
        %s319 = smul.u32 16, %s32
        %s320 = smul.u32 16, %s32
        %v321 = vld [vmem:[%s269] sm:$0xff]
        %v322 = vld [vmem:[%s269 + $0x8] sm:$0xff]
        %v323 = vld [vmem:[%s269 + $0x10] sm:$0xff]
        %v324 = vld [vmem:[%s269 + $0x18] sm:$0xff]
        %v325 = vld [vmem:[%s269 + $0x20] sm:$0xff]
        %v326 = vld [vmem:[%s269 + $0x28] sm:$0xff]
        %v327 = vld [vmem:[%s269 + $0x30] sm:$0xff]
        %v328 = vld [vmem:[%s269 + $0x38] sm:$0xff]
        %v329 = vld [vmem:[%s269 + $0x40] sm:$0xff]
        %v330 = vld [vmem:[%s269 + $0x48] sm:$0xff]
        %v331 = vld [vmem:[%s269 + $0x50] sm:$0xff]
        %v332 = vld [vmem:[%s269 + $0x58] sm:$0xff]
        %v333 = vld [vmem:[%s269 + $0x60] sm:$0xff]
        %v334 = vld [vmem:[%s269 + $0x68] sm:$0xff]
        %v335 = vld [vmem:[%s269 + $0x70] sm:$0xff]
        %v336 = vld [vmem:[%s269 + $0x78] sm:$0xff]
        %v337 = vld [vmem:[%s269 + $0x80] sm:$0xff]
        %v338 = vld [vmem:[%s269 + $0x88] sm:$0xff]
        %v339 = vld [vmem:[%s269 + $0x90] sm:$0xff]
        %v340 = vld [vmem:[%s269 + $0x98] sm:$0xff]
        %v341 = vld [vmem:[%s269 + $0xa0] sm:$0xff]
        %v342 = vld [vmem:[%s269 + $0xa8] sm:$0xff]
        %v343 = vld [vmem:[%s269 + $0xb0] sm:$0xff]
        %v344 = vld [vmem:[%s269 + $0xb8] sm:$0xff]
        %v345 = vld [vmem:[%s269 + $0xc0] sm:$0xff]
        %v346 = vld [vmem:[%s269 + $0xc8] sm:$0xff]
        %v347 = vld [vmem:[%s269 + $0xd0] sm:$0xff]
        %v348 = vld [vmem:[%s269 + $0xd8] sm:$0xff]
        %v349 = vld [vmem:[%s269 + $0xe0] sm:$0xff]
        %v350 = vld [vmem:[%s269 + $0xe8] sm:$0xff]
        %v351 = vld [vmem:[%s269 + $0xf0] sm:$0xff]
        %v352 = vld [vmem:[%s269 + $0xf8] sm:$0xff]
        %v353 = vld [vmem:[#allocation5] sm:$0x3]
        %v354 = vadd.f32 %v321, %v322
        %355 = vadd.xlane.f32.xlu0 %v354
        %v356 = vpop.xlane.xlu0 %355
        %v357 = vadd.f32 %v323, %v324
        %358 = vadd.xlane.f32.xlu0 %v357
        %v359 = vpop.xlane.xlu0 %358
        %v360 = vadd.f32 %v325, %v326
        %361 = vadd.xlane.f32.xlu0 %v360
        %v362 = vpop.xlane.xlu0 %361
        %v363 = vadd.f32 %v327, %v328
        %364 = vadd.xlane.f32.xlu0 %v363
        %v365 = vpop.xlane.xlu0 %364
        %v366 = vadd.f32 %v329, %v330
        %367 = vadd.xlane.f32.xlu0 %v366
        %v368 = vpop.xlane.xlu0 %367
        %v369 = vadd.f32 %v331, %v332
        %370 = vadd.xlane.f32.xlu0 %v369
        %v371 = vpop.xlane.xlu0 %370
        %v372 = vadd.f32 %v333, %v334
        %373 = vadd.xlane.f32.xlu0 %v372
        %v374 = vpop.xlane.xlu0 %373
        %v375 = vadd.f32 %v335, %v336
        %376 = vadd.xlane.f32.xlu0 %v375
        %v377 = vpop.xlane.xlu0 %376
        %v378 = vadd.f32 %v337, %v338
        %379 = vadd.xlane.f32.xlu0 %v378
        %v380 = vpop.xlane.xlu0 %379
        %v381 = vadd.f32 %v339, %v340
        %382 = vadd.xlane.f32.xlu0 %v381
        %v383 = vpop.xlane.xlu0 %382
        %v384 = vadd.f32 %v341, %v342
        %385 = vadd.xlane.f32.xlu0 %v384
        %v386 = vpop.xlane.xlu0 %385
        %v387 = vadd.f32 %v343, %v344
        %388 = vadd.xlane.f32.xlu0 %v387
        %v389 = vpop.xlane.xlu0 %388
        %v390 = vadd.f32 %v345, %v346
        %391 = vadd.xlane.f32.xlu0 %v390
        %v392 = vpop.xlane.xlu0 %391
        %v393 = vadd.f32 %v347, %v348
        %394 = vadd.xlane.f32.xlu0 %v393
        %v395 = vpop.xlane.xlu0 %394
        %v396 = vadd.f32 %v349, %v350
        %397 = vadd.xlane.f32.xlu0 %v396
        %v398 = vpop.xlane.xlu0 %397
        %v399 = vadd.f32 %v351, %v352
        %400 = vadd.xlane.f32.xlu0 %v399
        %v401 = vpop.xlane.xlu0 %400
        %v402 = vrcp.pop 256.0
        %v403 = vmul.f32 256.0, %v402
        %v404 = vsub.f32 1.0, %v403
        %v405 = vmul.f32 %v402, %v404
        %v406 = vadd.f32 %v402, %v405
        %vm407 = vweird.f32 %v402
        %v408 = vsel %vm407, %v402, %v406
        %v409 = vmul.f32 %v356, %v408
        %v410 = vmul.f32 %v359, %v408
        %v411 = vmul.f32 %v362, %v408
        %v412 = vmul.f32 %v365, %v408
        %v413 = vmul.f32 %v368, %v408
        %v414 = vmul.f32 %v371, %v408
        %v415 = vmul.f32 %v374, %v408
        %v416 = vmul.f32 %v377, %v408
        %v417 = vmul.f32 %v380, %v408
        %v418 = vmul.f32 %v383, %v408
        %v419 = vmul.f32 %v386, %v408
        %v420 = vmul.f32 %v389, %v408
        %v421 = vmul.f32 %v392, %v408
        %v422 = vmul.f32 %v395, %v408
        %v423 = vmul.f32 %v398, %v408
        %v424 = vmul.f32 %v401, %v408
        %v425 = vsub.f32 %v321, %v409
        %v426 = vsub.f32 %v322, %v409
        %v427 = vsub.f32 %v323, %v410
        %v428 = vsub.f32 %v324, %v410
        %v429 = vsub.f32 %v325, %v411
        %v430 = vsub.f32 %v326, %v411
        %v431 = vsub.f32 %v327, %v412
        %v432 = vsub.f32 %v328, %v412
        %v433 = vsub.f32 %v329, %v413
        %v434 = vsub.f32 %v330, %v413
        %v435 = vsub.f32 %v331, %v414
        %v436 = vsub.f32 %v332, %v414
        %v437 = vsub.f32 %v333, %v415
        %v438 = vsub.f32 %v334, %v415
        %v439 = vsub.f32 %v335, %v416
        %v440 = vsub.f32 %v336, %v416
        %v441 = vsub.f32 %v337, %v417
        %v442 = vsub.f32 %v338, %v417
        %v443 = vsub.f32 %v339, %v418
        %v444 = vsub.f32 %v340, %v418
        %v445 = vsub.f32 %v341, %v419
        %v446 = vsub.f32 %v342, %v419
        %v447 = vsub.f32 %v343, %v420
        %v448 = vsub.f32 %v344, %v420
        %v449 = vsub.f32 %v345, %v421
        %v450 = vsub.f32 %v346, %v421
        %v451 = vsub.f32 %v347, %v422
        %v452 = vsub.f32 %v348, %v422
        %v453 = vsub.f32 %v349, %v423
        %v454 = vsub.f32 %v350, %v423
        %v455 = vsub.f32 %v351, %v424
        %v456 = vsub.f32 %v352, %v424
        %v457 = vmul.f32 %v425, %v425
        %v458 = vmul.f32 %v426, %v426
        %v459 = vmul.f32 %v427, %v427
        %v460 = vmul.f32 %v428, %v428
        %v461 = vmul.f32 %v429, %v429
        %v462 = vmul.f32 %v430, %v430
        %v463 = vmul.f32 %v431, %v431
        %v464 = vmul.f32 %v432, %v432
        %v465 = vmul.f32 %v433, %v433
        %v466 = vmul.f32 %v434, %v434
        %v467 = vmul.f32 %v435, %v435
        %v468 = vmul.f32 %v436, %v436
        %v469 = vmul.f32 %v437, %v437
        %v470 = vmul.f32 %v438, %v438
        %v471 = vmul.f32 %v439, %v439
        %v472 = vmul.f32 %v440, %v440
        %v473 = vmul.f32 %v441, %v441
        %v474 = vmul.f32 %v442, %v442
        %v475 = vmul.f32 %v443, %v443
        %v476 = vmul.f32 %v444, %v444
        %v477 = vmul.f32 %v445, %v445
        %v478 = vmul.f32 %v446, %v446
        %v479 = vmul.f32 %v447, %v447
        %v480 = vmul.f32 %v448, %v448
        %v481 = vmul.f32 %v449, %v449
        %v482 = vmul.f32 %v450, %v450
        %v483 = vmul.f32 %v451, %v451
        %v484 = vmul.f32 %v452, %v452
        %v485 = vmul.f32 %v453, %v453
        %v486 = vmul.f32 %v454, %v454
        %v487 = vmul.f32 %v455, %v455
        %v488 = vmul.f32 %v456, %v456
        %v489 = vadd.f32 %v457, %v458
        %490 = vadd.xlane.f32.xlu0 %v489
        %v491 = vpop.xlane.xlu0 %490
        %v492 = vadd.f32 %v459, %v460
        %493 = vadd.xlane.f32.xlu0 %v492
        %v494 = vpop.xlane.xlu0 %493
        %v495 = vadd.f32 %v461, %v462
        %496 = vadd.xlane.f32.xlu0 %v495
        %v497 = vpop.xlane.xlu0 %496
        %v498 = vadd.f32 %v463, %v464
        %499 = vadd.xlane.f32.xlu0 %v498
        %v500 = vpop.xlane.xlu0 %499
        %v501 = vadd.f32 %v465, %v466
        %502 = vadd.xlane.f32.xlu0 %v501
        %v503 = vpop.xlane.xlu0 %502
        %v504 = vadd.f32 %v467, %v468
        %505 = vadd.xlane.f32.xlu0 %v504
        %v506 = vpop.xlane.xlu0 %505
        %v507 = vadd.f32 %v469, %v470
        %508 = vadd.xlane.f32.xlu0 %v507
        %v509 = vpop.xlane.xlu0 %508
        %v510 = vadd.f32 %v471, %v472
        %511 = vadd.xlane.f32.xlu0 %v510
        %v512 = vpop.xlane.xlu0 %511
        %v513 = vadd.f32 %v473, %v474
        %514 = vadd.xlane.f32.xlu0 %v513
        %v515 = vpop.xlane.xlu0 %514
        %v516 = vadd.f32 %v475, %v476
        %517 = vadd.xlane.f32.xlu0 %v516
        %v518 = vpop.xlane.xlu0 %517
        %v519 = vadd.f32 %v477, %v478
        %520 = vadd.xlane.f32.xlu0 %v519
        %v521 = vpop.xlane.xlu0 %520
        %v522 = vadd.f32 %v479, %v480
        %523 = vadd.xlane.f32.xlu0 %v522
        %v524 = vpop.xlane.xlu0 %523
        %v525 = vadd.f32 %v481, %v482
        %526 = vadd.xlane.f32.xlu0 %v525
        %v527 = vpop.xlane.xlu0 %526
        %v528 = vadd.f32 %v483, %v484
        %529 = vadd.xlane.f32.xlu0 %v528
        %v530 = vpop.xlane.xlu0 %529
        %v531 = vadd.f32 %v485, %v486
        %532 = vadd.xlane.f32.xlu0 %v531
        %v533 = vpop.xlane.xlu0 %532
        %v534 = vadd.f32 %v487, %v488
        %535 = vadd.xlane.f32.xlu0 %v534
        %v536 = vpop.xlane.xlu0 %535
        %v537 = vmul.f32 %v491, %v408
        %v538 = vmul.f32 %v494, %v408
        %v539 = vmul.f32 %v497, %v408
        %v540 = vmul.f32 %v500, %v408
        %v541 = vmul.f32 %v503, %v408
        %v542 = vmul.f32 %v506, %v408
        %v543 = vmul.f32 %v509, %v408
        %v544 = vmul.f32 %v512, %v408
        %v545 = vmul.f32 %v515, %v408
        %v546 = vmul.f32 %v518, %v408
        %v547 = vmul.f32 %v521, %v408
        %v548 = vmul.f32 %v524, %v408
        %v549 = vmul.f32 %v527, %v408
        %v550 = vmul.f32 %v530, %v408
        %v551 = vmul.f32 %v533, %v408
        %v552 = vmul.f32 %v536, %v408
        %v553 = vadd.f32 %v537, 1e-05
        %v554 = vadd.f32 %v538, 1e-05
        %v555 = vadd.f32 %v539, 1e-05
        %v556 = vadd.f32 %v540, 1e-05
        %v557 = vadd.f32 %v541, 1e-05
        %v558 = vadd.f32 %v542, 1e-05
        %v559 = vadd.f32 %v543, 1e-05
        %v560 = vadd.f32 %v544, 1e-05
        %v561 = vadd.f32 %v545, 1e-05
        %v562 = vadd.f32 %v546, 1e-05
        %v563 = vadd.f32 %v547, 1e-05
        %v564 = vadd.f32 %v548, 1e-05
        %v565 = vadd.f32 %v549, 1e-05
        %v566 = vadd.f32 %v550, 1e-05
        %v567 = vadd.f32 %v551, 1e-05
        %v568 = vadd.f32 %v552, 1e-05
        %v569 = vrsqrt.pop %v553
        %v570 = vmul.f32 %v569, %v553
        %v571 = vmul.f32 %v570, %v569
        %v572 = vmul.f32 0.5, %v571
        %v573 = vsub.f32 1.5, %v572
        %v574 = vmul.f32 %v569, %v573
        %vm575 = vweird.f32 %v553
        %vm576 = vweird.f32 %v569
        %vm577 = vmor %vm575, %vm576
        %v578 = vsel %vm577, %v569, %v574
        %v579 = vrsqrt.pop %v554
        %v580 = vmul.f32 %v579, %v554
        %v581 = vmul.f32 %v580, %v579
        %v582 = vmul.f32 0.5, %v581
        %v583 = vsub.f32 1.5, %v582
        %v584 = vmul.f32 %v579, %v583
        %vm585 = vweird.f32 %v554
        %vm586 = vweird.f32 %v579
        %vm587 = vmor %vm585, %vm586
        %v588 = vsel %vm587, %v579, %v584
        %v589 = vrsqrt.pop %v555
        %v590 = vmul.f32 %v589, %v555
        %v591 = vmul.f32 %v590, %v589
        %v592 = vmul.f32 0.5, %v591
        %v593 = vsub.f32 1.5, %v592
        %v594 = vmul.f32 %v589, %v593
        %vm595 = vweird.f32 %v555
        %vm596 = vweird.f32 %v589
        %vm597 = vmor %vm595, %vm596
        %v598 = vsel %vm597, %v589, %v594
        %v599 = vrsqrt.pop %v556
        %v600 = vmul.f32 %v599, %v556
        %v601 = vmul.f32 %v600, %v599
        %v602 = vmul.f32 0.5, %v601
        %v603 = vsub.f32 1.5, %v602
        %v604 = vmul.f32 %v599, %v603
        %vm605 = vweird.f32 %v556
        %vm606 = vweird.f32 %v599
        %vm607 = vmor %vm605, %vm606
        %v608 = vsel %vm607, %v599, %v604
        %v609 = vrsqrt.pop %v557
        %v610 = vmul.f32 %v609, %v557
        %v611 = vmul.f32 %v610, %v609
        %v612 = vmul.f32 0.5, %v611
        %v613 = vsub.f32 1.5, %v612
        %v614 = vmul.f32 %v609, %v613
        %vm615 = vweird.f32 %v557
        %vm616 = vweird.f32 %v609
        %vm617 = vmor %vm615, %vm616
        %v618 = vsel %vm617, %v609, %v614
        %v619 = vrsqrt.pop %v558
        %v620 = vmul.f32 %v619, %v558
        %v621 = vmul.f32 %v620, %v619
        %v622 = vmul.f32 0.5, %v621
        %v623 = vsub.f32 1.5, %v622
        %v624 = vmul.f32 %v619, %v623
        %vm625 = vweird.f32 %v558
        %vm626 = vweird.f32 %v619
        %vm627 = vmor %vm625, %vm626
        %v628 = vsel %vm627, %v619, %v624
        %v629 = vrsqrt.pop %v559
        %v630 = vmul.f32 %v629, %v559
        %v631 = vmul.f32 %v630, %v629
        %v632 = vmul.f32 0.5, %v631
        %v633 = vsub.f32 1.5, %v632
        %v634 = vmul.f32 %v629, %v633
        %vm635 = vweird.f32 %v559
        %vm636 = vweird.f32 %v629
        %vm637 = vmor %vm635, %vm636
        %v638 = vsel %vm637, %v629, %v634
        %v639 = vrsqrt.pop %v560
        %v640 = vmul.f32 %v639, %v560
        %v641 = vmul.f32 %v640, %v639
        %v642 = vmul.f32 0.5, %v641
        %v643 = vsub.f32 1.5, %v642
        %v644 = vmul.f32 %v639, %v643
        %vm645 = vweird.f32 %v560
        %vm646 = vweird.f32 %v639
        %vm647 = vmor %vm645, %vm646
        %v648 = vsel %vm647, %v639, %v644
        %v649 = vrsqrt.pop %v561
        %v650 = vmul.f32 %v649, %v561
        %v651 = vmul.f32 %v650, %v649
        %v652 = vmul.f32 0.5, %v651
        %v653 = vsub.f32 1.5, %v652
        %v654 = vmul.f32 %v649, %v653
        %vm655 = vweird.f32 %v561
        %vm656 = vweird.f32 %v649
        %vm657 = vmor %vm655, %vm656
        %v658 = vsel %vm657, %v649, %v654
        %v659 = vrsqrt.pop %v562
        %v660 = vmul.f32 %v659, %v562
        %v661 = vmul.f32 %v660, %v659
        %v662 = vmul.f32 0.5, %v661
        %v663 = vsub.f32 1.5, %v662
        %v664 = vmul.f32 %v659, %v663
        %vm665 = vweird.f32 %v562
        %vm666 = vweird.f32 %v659
        %vm667 = vmor %vm665, %vm666
        %v668 = vsel %vm667, %v659, %v664
        %v669 = vrsqrt.pop %v563
        %v670 = vmul.f32 %v669, %v563
        %v671 = vmul.f32 %v670, %v669
        %v672 = vmul.f32 0.5, %v671
        %v673 = vsub.f32 1.5, %v672
        %v674 = vmul.f32 %v669, %v673
        %vm675 = vweird.f32 %v563
        %vm676 = vweird.f32 %v669
        %vm677 = vmor %vm675, %vm676
        %v678 = vsel %vm677, %v669, %v674
        %v679 = vrsqrt.pop %v564
        %v680 = vmul.f32 %v679, %v564
        %v681 = vmul.f32 %v680, %v679
        %v682 = vmul.f32 0.5, %v681
        %v683 = vsub.f32 1.5, %v682
        %v684 = vmul.f32 %v679, %v683
        %vm685 = vweird.f32 %v564
        %vm686 = vweird.f32 %v679
        %vm687 = vmor %vm685, %vm686
        %v688 = vsel %vm687, %v679, %v684
        %v689 = vrsqrt.pop %v565
        %v690 = vmul.f32 %v689, %v565
        %v691 = vmul.f32 %v690, %v689
        %v692 = vmul.f32 0.5, %v691
        %v693 = vsub.f32 1.5, %v692
        %v694 = vmul.f32 %v689, %v693
        %vm695 = vweird.f32 %v565
        %vm696 = vweird.f32 %v689
        %vm697 = vmor %vm695, %vm696
        %v698 = vsel %vm697, %v689, %v694
        %v699 = vrsqrt.pop %v566
        %v700 = vmul.f32 %v699, %v566
        %v701 = vmul.f32 %v700, %v699
        %v702 = vmul.f32 0.5, %v701
        %v703 = vsub.f32 1.5, %v702
        %v704 = vmul.f32 %v699, %v703
        %vm705 = vweird.f32 %v566
        %vm706 = vweird.f32 %v699
        %vm707 = vmor %vm705, %vm706
        %v708 = vsel %vm707, %v699, %v704
        %v709 = vrsqrt.pop %v567
        %v710 = vmul.f32 %v709, %v567
        %v711 = vmul.f32 %v710, %v709
        %v712 = vmul.f32 0.5, %v711
        %v713 = vsub.f32 1.5, %v712
        %v714 = vmul.f32 %v709, %v713
        %vm715 = vweird.f32 %v567
        %vm716 = vweird.f32 %v709
        %vm717 = vmor %vm715, %vm716
        %v718 = vsel %vm717, %v709, %v714
        %v719 = vrsqrt.pop %v568
        %v720 = vmul.f32 %v719, %v568
        %v721 = vmul.f32 %v720, %v719
        %v722 = vmul.f32 0.5, %v721
        %v723 = vsub.f32 1.5, %v722
        %v724 = vmul.f32 %v719, %v723
        %vm725 = vweird.f32 %v568
        %vm726 = vweird.f32 %v719
        %vm727 = vmor %vm725, %vm726
        %v728 = vsel %vm727, %v719, %v724
        %v729 = vmul.f32 %v425, %v578
        %v730 = vmul.f32 %v426, %v578
        %v731 = vmul.f32 %v427, %v588
        %v732 = vmul.f32 %v428, %v588
        %v733 = vmul.f32 %v429, %v598
        %v734 = vmul.f32 %v430, %v598
        %v735 = vmul.f32 %v431, %v608
        %v736 = vmul.f32 %v432, %v608
        %v737 = vmul.f32 %v433, %v618
        %v738 = vmul.f32 %v434, %v618
        %v739 = vmul.f32 %v435, %v628
        %v740 = vmul.f32 %v436, %v628
        %v741 = vmul.f32 %v437, %v638
        %v742 = vmul.f32 %v438, %v638
        %v743 = vmul.f32 %v439, %v648
        %v744 = vmul.f32 %v440, %v648
        %v745 = vmul.f32 %v441, %v658
        %v746 = vmul.f32 %v442, %v658
        %v747 = vmul.f32 %v443, %v668
        %v748 = vmul.f32 %v444, %v668
        %v749 = vmul.f32 %v445, %v678
        %v750 = vmul.f32 %v446, %v678
        %v751 = vmul.f32 %v447, %v688
        %v752 = vmul.f32 %v448, %v688
        %v753 = vmul.f32 %v449, %v698
        %v754 = vmul.f32 %v450, %v698
        %v755 = vmul.f32 %v451, %v708
        %v756 = vmul.f32 %v452, %v708
        %v757 = vmul.f32 %v453, %v718
        %v758 = vmul.f32 %v454, %v718
        %v759 = vmul.f32 %v455, %v728
        %v760 = vmul.f32 %v456, %v728
        %v762 = vperm.slane %v353, 0
        %v763 = vperm.slane %v353, 1
        %v766 = vmul.f32 %v729, %v762
        %v767 = vmul.f32 %v730, %v763
        %v768 = vmul.f32 %v731, %v762
        %v769 = vmul.f32 %v732, %v763
        %v770 = vmul.f32 %v733, %v762
        %v771 = vmul.f32 %v734, %v763
        %v772 = vmul.f32 %v735, %v762
        %v773 = vmul.f32 %v736, %v763
        %v774 = vmul.f32 %v737, %v762
        %v775 = vmul.f32 %v738, %v763
        %v776 = vmul.f32 %v739, %v762
        %v777 = vmul.f32 %v740, %v763
        %v778 = vmul.f32 %v741, %v762
        %v779 = vmul.f32 %v742, %v763
        %v780 = vmul.f32 %v743, %v762
        %v781 = vmul.f32 %v744, %v763
        %v782 = vmul.f32 %v745, %v762
        %v783 = vmul.f32 %v746, %v763
        %v784 = vmul.f32 %v747, %v762
        %v785 = vmul.f32 %v748, %v763
        %v786 = vmul.f32 %v749, %v762
        %v787 = vmul.f32 %v750, %v763
        %v788 = vmul.f32 %v751, %v762
        %v789 = vmul.f32 %v752, %v763
        %v790 = vmul.f32 %v753, %v762
        %v791 = vmul.f32 %v754, %v763
        %v792 = vmul.f32 %v755, %v762
        %v793 = vmul.f32 %v756, %v763
        %v794 = vmul.f32 %v757, %v762
        %v795 = vmul.f32 %v758, %v763
        %v796 = vmul.f32 %v759, %v762
        %v797 = vmul.f32 %v760, %v763
        %v798 = vpack.c.bf16 %v768, %v766
        %v799 = vpack.c.bf16 %v769, %v767
        %v800 = vpack.c.bf16 %v772, %v770
        %v801 = vpack.c.bf16 %v773, %v771
        %v802 = vpack.c.bf16 %v776, %v774
        %v803 = vpack.c.bf16 %v777, %v775
        %v804 = vpack.c.bf16 %v780, %v778
        %v805 = vpack.c.bf16 %v781, %v779
        %v806 = vpack.c.bf16 %v784, %v782
        %v807 = vpack.c.bf16 %v785, %v783
        %v808 = vpack.c.bf16 %v788, %v786
        %v809 = vpack.c.bf16 %v789, %v787
        %v810 = vpack.c.bf16 %v792, %v790
        %v811 = vpack.c.bf16 %v793, %v791
        %v812 = vpack.c.bf16 %v796, %v794
        %v813 = vpack.c.bf16 %v797, %v795
        %v814 = vld [vmem:[#allocation7] sm:$0xff]
        %v815 = vld [vmem:[#allocation7 + $0x8] sm:$0xff]
        %v816 = vld [vmem:[#allocation7 + $0x10] sm:$0xff]
        %v817 = vld [vmem:[#allocation7 + $0x18] sm:$0xff]
        %v818 = vld [vmem:[#allocation7 + $0x20] sm:$0xff]
        %v819 = vld [vmem:[#allocation7 + $0x28] sm:$0xff]
        %v820 = vld [vmem:[#allocation7 + $0x30] sm:$0xff]
        %v821 = vld [vmem:[#allocation7 + $0x38] sm:$0xff]
        %v822 = vld [vmem:[#allocation7 + $0x40] sm:$0xff]
        %v823 = vld [vmem:[#allocation7 + $0x48] sm:$0xff]
        %v824 = vld [vmem:[#allocation7 + $0x50] sm:$0xff]
        %v825 = vld [vmem:[#allocation7 + $0x58] sm:$0xff]
        %v826 = vld [vmem:[#allocation7 + $0x60] sm:$0xff]
        %v827 = vld [vmem:[#allocation7 + $0x68] sm:$0xff]
        %v828 = vld [vmem:[#allocation7 + $0x70] sm:$0xff]
        %v829 = vld [vmem:[#allocation7 + $0x78] sm:$0xff]
        %v830 = vld [vmem:[#allocation7 + $0x80] sm:$0xff]
        %v831 = vld [vmem:[#allocation7 + $0x88] sm:$0xff]
        %v832 = vld [vmem:[#allocation7 + $0x90] sm:$0xff]
        %v833 = vld [vmem:[#allocation7 + $0x98] sm:$0xff]
        %v834 = vld [vmem:[#allocation7 + $0xa0] sm:$0xff]
        %v835 = vld [vmem:[#allocation7 + $0xa8] sm:$0xff]
        %v836 = vld [vmem:[#allocation7 + $0xb0] sm:$0xff]
        %v837 = vld [vmem:[#allocation7 + $0xb8] sm:$0xff]
        %v838 = vld [vmem:[#allocation7 + $0xc0] sm:$0xff]
        %v839 = vld [vmem:[#allocation7 + $0xc8] sm:$0xff]
        %v840 = vld [vmem:[#allocation7 + $0xd0] sm:$0xff]
        %v841 = vld [vmem:[#allocation7 + $0xd8] sm:$0xff]
        %v842 = vld [vmem:[#allocation7 + $0xe0] sm:$0xff]
        %v843 = vld [vmem:[#allocation7 + $0xe8] sm:$0xff]
        %v844 = vld [vmem:[#allocation7 + $0xf0] sm:$0xff]
        %v845 = vld [vmem:[#allocation7 + $0xf8] sm:$0xff]
        %v846 = vld [vmem:[#allocation7 + $0x100] sm:$0xff]
        %v847 = vld [vmem:[#allocation7 + $0x108] sm:$0xff]
        %v848 = vld [vmem:[#allocation7 + $0x110] sm:$0xff]
        %v849 = vld [vmem:[#allocation7 + $0x118] sm:$0xff]
        %v850 = vld [vmem:[#allocation7 + $0x120] sm:$0xff]
        %v851 = vld [vmem:[#allocation7 + $0x128] sm:$0xff]
        %v852 = vld [vmem:[#allocation7 + $0x130] sm:$0xff]
        %v853 = vld [vmem:[#allocation7 + $0x138] sm:$0xff]
        %v854 = vld [vmem:[#allocation7 + $0x140] sm:$0xff]
        %v855 = vld [vmem:[#allocation7 + $0x148] sm:$0xff]
        %v856 = vld [vmem:[#allocation7 + $0x150] sm:$0xff]
        %v857 = vld [vmem:[#allocation7 + $0x158] sm:$0xff]
        %v858 = vld [vmem:[#allocation7 + $0x160] sm:$0xff]
        %v859 = vld [vmem:[#allocation7 + $0x168] sm:$0xff]
        %v860 = vld [vmem:[#allocation7 + $0x170] sm:$0xff]
        %v861 = vld [vmem:[#allocation7 + $0x178] sm:$0xff]
        %v862 = vld [vmem:[#allocation7 + $0x180] sm:$0xff]
        %v863 = vld [vmem:[#allocation7 + $0x188] sm:$0xff]
        %v864 = vld [vmem:[#allocation7 + $0x190] sm:$0xff]
        %v865 = vld [vmem:[#allocation7 + $0x198] sm:$0xff]
        %v866 = vld [vmem:[#allocation7 + $0x1a0] sm:$0xff]
        %v867 = vld [vmem:[#allocation7 + $0x1a8] sm:$0xff]
        %v868 = vld [vmem:[#allocation7 + $0x1b0] sm:$0xff]
        %v869 = vld [vmem:[#allocation7 + $0x1b8] sm:$0xff]
        %v870 = vld [vmem:[#allocation7 + $0x1c0] sm:$0xff]
        %v871 = vld [vmem:[#allocation7 + $0x1c8] sm:$0xff]
        %v872 = vld [vmem:[#allocation7 + $0x1d0] sm:$0xff]
        %v873 = vld [vmem:[#allocation7 + $0x1d8] sm:$0xff]
        %v874 = vld [vmem:[#allocation7 + $0x1e0] sm:$0xff]
        %v875 = vld [vmem:[#allocation7 + $0x1e8] sm:$0xff]
        %v876 = vld [vmem:[#allocation7 + $0x1f0] sm:$0xff]
        %v877 = vld [vmem:[#allocation7 + $0x1f8] sm:$0xff]
        %v878 = vld [vmem:[#allocation7 + $0x200] sm:$0xff]
        %v879 = vld [vmem:[#allocation7 + $0x208] sm:$0xff]
        %v880 = vld [vmem:[#allocation7 + $0x210] sm:$0xff]
        %v881 = vld [vmem:[#allocation7 + $0x218] sm:$0xff]
        %v882 = vld [vmem:[#allocation7 + $0x220] sm:$0xff]
        %v883 = vld [vmem:[#allocation7 + $0x228] sm:$0xff]
        %v884 = vld [vmem:[#allocation7 + $0x230] sm:$0xff]
        %v885 = vld [vmem:[#allocation7 + $0x238] sm:$0xff]
        %v886 = vld [vmem:[#allocation7 + $0x240] sm:$0xff]
        %v887 = vld [vmem:[#allocation7 + $0x248] sm:$0xff]
        %v888 = vld [vmem:[#allocation7 + $0x250] sm:$0xff]
        %v889 = vld [vmem:[#allocation7 + $0x258] sm:$0xff]
        %v890 = vld [vmem:[#allocation7 + $0x260] sm:$0xff]
        %v891 = vld [vmem:[#allocation7 + $0x268] sm:$0xff]
        %v892 = vld [vmem:[#allocation7 + $0x270] sm:$0xff]
        %v893 = vld [vmem:[#allocation7 + $0x278] sm:$0xff]
        %v894 = vld [vmem:[#allocation7 + $0x280] sm:$0xff]
        %v895 = vld [vmem:[#allocation7 + $0x288] sm:$0xff]
        %v896 = vld [vmem:[#allocation7 + $0x290] sm:$0xff]
        %v897 = vld [vmem:[#allocation7 + $0x298] sm:$0xff]
        %v898 = vld [vmem:[#allocation7 + $0x2a0] sm:$0xff]
        %v899 = vld [vmem:[#allocation7 + $0x2a8] sm:$0xff]
        %v900 = vld [vmem:[#allocation7 + $0x2b0] sm:$0xff]
        %v901 = vld [vmem:[#allocation7 + $0x2b8] sm:$0xff]
        %v902 = vld [vmem:[#allocation7 + $0x2c0] sm:$0xff]
        %v903 = vld [vmem:[#allocation7 + $0x2c8] sm:$0xff]
        %v904 = vld [vmem:[#allocation7 + $0x2d0] sm:$0xff]
        %v905 = vld [vmem:[#allocation7 + $0x2d8] sm:$0xff]
        %v906 = vld [vmem:[#allocation7 + $0x2e0] sm:$0xff]
        %v907 = vld [vmem:[#allocation7 + $0x2e8] sm:$0xff]
        %v908 = vld [vmem:[#allocation7 + $0x2f0] sm:$0xff]
        %v909 = vld [vmem:[#allocation7 + $0x2f8] sm:$0xff]
        %v1006 = vunpack.c.l.b16 %v814
        %v1007 = vunpack.c.h.b16 %v814
        %v1008 = vunpack.c.l.b16 %v815
        %v1009 = vunpack.c.h.b16 %v815
        %v1010 = vunpack.c.l.b16 %v816
        %v1011 = vunpack.c.h.b16 %v816
        %v1012 = vunpack.c.l.b16 %v817
        %v1013 = vunpack.c.h.b16 %v817
        %v1014 = vunpack.c.l.b16 %v818
        %v1015 = vunpack.c.h.b16 %v818
        %v1016 = vunpack.c.l.b16 %v819
        %v1017 = vunpack.c.h.b16 %v819
        %v1018 = vunpack.c.l.b16 %v820
        %v1019 = vunpack.c.h.b16 %v820
        %v1020 = vunpack.c.l.b16 %v821
        %v1021 = vunpack.c.h.b16 %v821
        %v1022 = vunpack.c.l.b16 %v822
        %v1023 = vunpack.c.h.b16 %v822
        %v1024 = vunpack.c.l.b16 %v823
        %v1025 = vunpack.c.h.b16 %v823
        %v1026 = vunpack.c.l.b16 %v824
        %v1027 = vunpack.c.h.b16 %v824
        %v1028 = vunpack.c.l.b16 %v825
        %v1029 = vunpack.c.h.b16 %v825
        %v1030 = vunpack.c.l.b16 %v826
        %v1031 = vunpack.c.h.b16 %v826
        %v1032 = vunpack.c.l.b16 %v827
        %v1033 = vunpack.c.h.b16 %v827
        %v1034 = vunpack.c.l.b16 %v828
        %v1035 = vunpack.c.h.b16 %v828
        %v1036 = vunpack.c.l.b16 %v829
        %v1037 = vunpack.c.h.b16 %v829
        %v1038 = vunpack.c.l.b16 %v830
        %v1039 = vunpack.c.h.b16 %v830
        %v1040 = vunpack.c.l.b16 %v831
        %v1041 = vunpack.c.h.b16 %v831
        %v1042 = vunpack.c.l.b16 %v832
        %v1043 = vunpack.c.h.b16 %v832
        %v1044 = vunpack.c.l.b16 %v833
        %v1045 = vunpack.c.h.b16 %v833
        %v1046 = vunpack.c.l.b16 %v834
        %v1047 = vunpack.c.h.b16 %v834
        %v1048 = vunpack.c.l.b16 %v835
        %v1049 = vunpack.c.h.b16 %v835
        %v1050 = vunpack.c.l.b16 %v836
        %v1051 = vunpack.c.h.b16 %v836
        %v1052 = vunpack.c.l.b16 %v837
        %v1053 = vunpack.c.h.b16 %v837
        %v1054 = vunpack.c.l.b16 %v838
        %v1055 = vunpack.c.h.b16 %v838
        %v1056 = vunpack.c.l.b16 %v839
        %v1057 = vunpack.c.h.b16 %v839
        %v1058 = vunpack.c.l.b16 %v840
        %v1059 = vunpack.c.h.b16 %v840
        %v1060 = vunpack.c.l.b16 %v841
        %v1061 = vunpack.c.h.b16 %v841
        %v1062 = vunpack.c.l.b16 %v842
        %v1063 = vunpack.c.h.b16 %v842
        %v1064 = vunpack.c.l.b16 %v843
        %v1065 = vunpack.c.h.b16 %v843
        %v1066 = vunpack.c.l.b16 %v844
        %v1067 = vunpack.c.h.b16 %v844
        %v1068 = vunpack.c.l.b16 %v845
        %v1069 = vunpack.c.h.b16 %v845
        %v1070 = vunpack.c.l.b16 %v846
        %v1071 = vunpack.c.h.b16 %v846
        %v1072 = vunpack.c.l.b16 %v847
        %v1073 = vunpack.c.h.b16 %v847
        %v1074 = vunpack.c.l.b16 %v848
        %v1075 = vunpack.c.h.b16 %v848
        %v1076 = vunpack.c.l.b16 %v849
        %v1077 = vunpack.c.h.b16 %v849
        %v1078 = vunpack.c.l.b16 %v850
        %v1079 = vunpack.c.h.b16 %v850
        %v1080 = vunpack.c.l.b16 %v851
        %v1081 = vunpack.c.h.b16 %v851
        %v1082 = vunpack.c.l.b16 %v852
        %v1083 = vunpack.c.h.b16 %v852
        %v1084 = vunpack.c.l.b16 %v853
        %v1085 = vunpack.c.h.b16 %v853
        %v1086 = vunpack.c.l.b16 %v854
        %v1087 = vunpack.c.h.b16 %v854
        %v1088 = vunpack.c.l.b16 %v855
        %v1089 = vunpack.c.h.b16 %v855
        %v1090 = vunpack.c.l.b16 %v856
        %v1091 = vunpack.c.h.b16 %v856
        %v1092 = vunpack.c.l.b16 %v857
        %v1093 = vunpack.c.h.b16 %v857
        %v1094 = vunpack.c.l.b16 %v858
        %v1095 = vunpack.c.h.b16 %v858
        %v1096 = vunpack.c.l.b16 %v859
        %v1097 = vunpack.c.h.b16 %v859
        %v1098 = vunpack.c.l.b16 %v860
        %v1099 = vunpack.c.h.b16 %v860
        %v1100 = vunpack.c.l.b16 %v861
        %v1101 = vunpack.c.h.b16 %v861
        %v1102 = vunpack.c.l.b16 %v862
        %v1103 = vunpack.c.h.b16 %v862
        %v1104 = vunpack.c.l.b16 %v863
        %v1105 = vunpack.c.h.b16 %v863
        %v1106 = vunpack.c.l.b16 %v864
        %v1107 = vunpack.c.h.b16 %v864
        %v1108 = vunpack.c.l.b16 %v865
        %v1109 = vunpack.c.h.b16 %v865
        %v1110 = vunpack.c.l.b16 %v866
        %v1111 = vunpack.c.h.b16 %v866
        %v1112 = vunpack.c.l.b16 %v867
        %v1113 = vunpack.c.h.b16 %v867
        %v1114 = vunpack.c.l.b16 %v868
        %v1115 = vunpack.c.h.b16 %v868
        %v1116 = vunpack.c.l.b16 %v869
        %v1117 = vunpack.c.h.b16 %v869
        %v1118 = vunpack.c.l.b16 %v870
        %v1119 = vunpack.c.h.b16 %v870
        %v1120 = vunpack.c.l.b16 %v871
        %v1121 = vunpack.c.h.b16 %v871
        %v1122 = vunpack.c.l.b16 %v872
        %v1123 = vunpack.c.h.b16 %v872
        %v1124 = vunpack.c.l.b16 %v873
        %v1125 = vunpack.c.h.b16 %v873
        %v1126 = vunpack.c.l.b16 %v874
        %v1127 = vunpack.c.h.b16 %v874
        %v1128 = vunpack.c.l.b16 %v875
        %v1129 = vunpack.c.h.b16 %v875
        %v1130 = vunpack.c.l.b16 %v876
        %v1131 = vunpack.c.h.b16 %v876
        %v1132 = vunpack.c.l.b16 %v877
        %v1133 = vunpack.c.h.b16 %v877
        %v1134 = vunpack.c.l.b16 %v878
        %v1135 = vunpack.c.h.b16 %v878
        %v1136 = vunpack.c.l.b16 %v879
        %v1137 = vunpack.c.h.b16 %v879
        %v1138 = vunpack.c.l.b16 %v880
        %v1139 = vunpack.c.h.b16 %v880
        %v1140 = vunpack.c.l.b16 %v881
        %v1141 = vunpack.c.h.b16 %v881
        %v1142 = vunpack.c.l.b16 %v882
        %v1143 = vunpack.c.h.b16 %v882
        %v1144 = vunpack.c.l.b16 %v883
        %v1145 = vunpack.c.h.b16 %v883
        %v1146 = vunpack.c.l.b16 %v884
        %v1147 = vunpack.c.h.b16 %v884
        %v1148 = vunpack.c.l.b16 %v885
        %v1149 = vunpack.c.h.b16 %v885
        %v1150 = vunpack.c.l.b16 %v886
        %v1151 = vunpack.c.h.b16 %v886
        %v1152 = vunpack.c.l.b16 %v887
        %v1153 = vunpack.c.h.b16 %v887
        %v1154 = vunpack.c.l.b16 %v888
        %v1155 = vunpack.c.h.b16 %v888
        %v1156 = vunpack.c.l.b16 %v889
        %v1157 = vunpack.c.h.b16 %v889
        %v1158 = vunpack.c.l.b16 %v890
        %v1159 = vunpack.c.h.b16 %v890
        %v1160 = vunpack.c.l.b16 %v891
        %v1161 = vunpack.c.h.b16 %v891
        %v1162 = vunpack.c.l.b16 %v892
        %v1163 = vunpack.c.h.b16 %v892
        %v1164 = vunpack.c.l.b16 %v893
        %v1165 = vunpack.c.h.b16 %v893
        %v1166 = vunpack.c.l.b16 %v894
        %v1167 = vunpack.c.h.b16 %v894
        %v1168 = vunpack.c.l.b16 %v895
        %v1169 = vunpack.c.h.b16 %v895
        %v1170 = vunpack.c.l.b16 %v896
        %v1171 = vunpack.c.h.b16 %v896
        %v1172 = vunpack.c.l.b16 %v897
        %v1173 = vunpack.c.h.b16 %v897
        %v1174 = vunpack.c.l.b16 %v898
        %v1175 = vunpack.c.h.b16 %v898
        %v1176 = vunpack.c.l.b16 %v899
        %v1177 = vunpack.c.h.b16 %v899
        %v1178 = vunpack.c.l.b16 %v900
        %v1179 = vunpack.c.h.b16 %v900
        %v1180 = vunpack.c.l.b16 %v901
        %v1181 = vunpack.c.h.b16 %v901
        %v1182 = vunpack.c.l.b16 %v902
        %v1183 = vunpack.c.h.b16 %v902
        %v1184 = vunpack.c.l.b16 %v903
        %v1185 = vunpack.c.h.b16 %v903
        %v1186 = vunpack.c.l.b16 %v904
        %v1187 = vunpack.c.h.b16 %v904
        %v1188 = vunpack.c.l.b16 %v905
        %v1189 = vunpack.c.h.b16 %v905
        %v1190 = vunpack.c.l.b16 %v906
        %v1191 = vunpack.c.h.b16 %v906
        %v1192 = vunpack.c.l.b16 %v907
        %v1193 = vunpack.c.h.b16 %v907
        %v1194 = vunpack.c.l.b16 %v908
        %v1195 = vunpack.c.h.b16 %v908
        %v1196 = vunpack.c.l.b16 %v909
        %v1197 = vunpack.c.h.b16 %v909
        %v1198 = vpack.c.b16 %v1012, %v1006
        %v1199 = vpack.c.b16 %v1013, %v1007
        %v1200 = vpack.c.b16 %v1014, %v1008
        %v1201 = vpack.c.b16 %v1015, %v1009
        %v1202 = vpack.c.b16 %v1016, %v1010
        %v1203 = vpack.c.b16 %v1017, %v1011
        %v1204 = vpack.c.b16 %v1024, %v1018
        %v1205 = vpack.c.b16 %v1025, %v1019
        %v1206 = vpack.c.b16 %v1026, %v1020
        %v1207 = vpack.c.b16 %v1027, %v1021
        %v1208 = vpack.c.b16 %v1028, %v1022
        %v1209 = vpack.c.b16 %v1029, %v1023
        %v1210 = vpack.c.b16 %v1036, %v1030
        %v1211 = vpack.c.b16 %v1037, %v1031
        %v1212 = vpack.c.b16 %v1038, %v1032
        %v1213 = vpack.c.b16 %v1039, %v1033
        %v1214 = vpack.c.b16 %v1040, %v1034
        %v1215 = vpack.c.b16 %v1041, %v1035
        %v1216 = vpack.c.b16 %v1048, %v1042
        %v1217 = vpack.c.b16 %v1049, %v1043
        %v1218 = vpack.c.b16 %v1050, %v1044
        %v1219 = vpack.c.b16 %v1051, %v1045
        %v1220 = vpack.c.b16 %v1052, %v1046
        %v1221 = vpack.c.b16 %v1053, %v1047
        %v1222 = vpack.c.b16 %v1060, %v1054
        %v1223 = vpack.c.b16 %v1061, %v1055
        %v1224 = vpack.c.b16 %v1062, %v1056
        %v1225 = vpack.c.b16 %v1063, %v1057
        %v1226 = vpack.c.b16 %v1064, %v1058
        %v1227 = vpack.c.b16 %v1065, %v1059
        %v1228 = vpack.c.b16 %v1072, %v1066
        %v1229 = vpack.c.b16 %v1073, %v1067
        %v1230 = vpack.c.b16 %v1074, %v1068
        %v1231 = vpack.c.b16 %v1075, %v1069
        %v1232 = vpack.c.b16 %v1076, %v1070
        %v1233 = vpack.c.b16 %v1077, %v1071
        %v1234 = vpack.c.b16 %v1084, %v1078
        %v1235 = vpack.c.b16 %v1085, %v1079
        %v1236 = vpack.c.b16 %v1086, %v1080
        %v1237 = vpack.c.b16 %v1087, %v1081
        %v1238 = vpack.c.b16 %v1088, %v1082
        %v1239 = vpack.c.b16 %v1089, %v1083
        %v1240 = vpack.c.b16 %v1096, %v1090
        %v1241 = vpack.c.b16 %v1097, %v1091
        %v1242 = vpack.c.b16 %v1098, %v1092
        %v1243 = vpack.c.b16 %v1099, %v1093
        %v1244 = vpack.c.b16 %v1100, %v1094
        %v1245 = vpack.c.b16 %v1101, %v1095
        %v1246 = vpack.c.b16 %v1108, %v1102
        %v1247 = vpack.c.b16 %v1109, %v1103
        %v1248 = vpack.c.b16 %v1110, %v1104
        %v1249 = vpack.c.b16 %v1111, %v1105
        %v1250 = vpack.c.b16 %v1112, %v1106
        %v1251 = vpack.c.b16 %v1113, %v1107
        %v1252 = vpack.c.b16 %v1120, %v1114
        %v1253 = vpack.c.b16 %v1121, %v1115
        %v1254 = vpack.c.b16 %v1122, %v1116
        %v1255 = vpack.c.b16 %v1123, %v1117
        %v1256 = vpack.c.b16 %v1124, %v1118
        %v1257 = vpack.c.b16 %v1125, %v1119
        %v1258 = vpack.c.b16 %v1132, %v1126
        %v1259 = vpack.c.b16 %v1133, %v1127
        %v1260 = vpack.c.b16 %v1134, %v1128
        %v1261 = vpack.c.b16 %v1135, %v1129
        %v1262 = vpack.c.b16 %v1136, %v1130
        %v1263 = vpack.c.b16 %v1137, %v1131
        %v1264 = vpack.c.b16 %v1144, %v1138
        %v1265 = vpack.c.b16 %v1145, %v1139
        %v1266 = vpack.c.b16 %v1146, %v1140
        %v1267 = vpack.c.b16 %v1147, %v1141
        %v1268 = vpack.c.b16 %v1148, %v1142
        %v1269 = vpack.c.b16 %v1149, %v1143
        %v1270 = vpack.c.b16 %v1156, %v1150
        %v1271 = vpack.c.b16 %v1157, %v1151
        %v1272 = vpack.c.b16 %v1158, %v1152
        %v1273 = vpack.c.b16 %v1159, %v1153
        %v1274 = vpack.c.b16 %v1160, %v1154
        %v1275 = vpack.c.b16 %v1161, %v1155
        %v1276 = vpack.c.b16 %v1168, %v1162
        %v1277 = vpack.c.b16 %v1169, %v1163
        %v1278 = vpack.c.b16 %v1170, %v1164
        %v1279 = vpack.c.b16 %v1171, %v1165
        %v1280 = vpack.c.b16 %v1172, %v1166
        %v1281 = vpack.c.b16 %v1173, %v1167
        %v1282 = vpack.c.b16 %v1180, %v1174
        %v1283 = vpack.c.b16 %v1181, %v1175
        %v1284 = vpack.c.b16 %v1182, %v1176
        %v1285 = vpack.c.b16 %v1183, %v1177
        %v1286 = vpack.c.b16 %v1184, %v1178
        %v1287 = vpack.c.b16 %v1185, %v1179
        %v1288 = vpack.c.b16 %v1192, %v1186
        %v1289 = vpack.c.b16 %v1193, %v1187
        %v1290 = vpack.c.b16 %v1194, %v1188
        %v1291 = vpack.c.b16 %v1195, %v1189
        %v1292 = vpack.c.b16 %v1196, %v1190
        %v1293 = vpack.c.b16 %v1197, %v1191
        %1390 = vmatpush.bf16.msra.mxu0 %v1240
        %1391 = vmatpush.bf16.msra.mxu0 %v1234
        %1392 = vmatpush.bf16.msra.mxu0 %v1228
        %1393 = vmatpush.bf16.msra.mxu0 %v1222
        %1394 = vmatpush.bf16.msra.mxu0 %v1216
        %1395 = vmatpush.bf16.msra.mxu0 %v1210
        %1396 = vmatpush.bf16.msra.mxu0 %v1204
        %1397 = vmatpush.bf16.msra.mxu0 %v1198
        %1398 = vmatmul.bf16.gmra.mxu0 %v798
        %v1399 = vpop.f32.mrf.mxu0
        %v1400 = vadd.f32 0.0, %v1399
        %v1401 = vpop.f32.mrf.mxu0
        %v1402 = vadd.f32 0.0, %v1401
        %1403 = vmatmul.bf16.gmra.mxu0 %v800
        %v1404 = vpop.f32.mrf.mxu0
        %v1405 = vadd.f32 0.0, %v1404
        %v1406 = vpop.f32.mrf.mxu0
        %v1407 = vadd.f32 0.0, %v1406
        %1408 = vmatmul.bf16.gmra.mxu0 %v802
        %v1409 = vpop.f32.mrf.mxu0
        %v1410 = vadd.f32 0.0, %v1409
        %v1411 = vpop.f32.mrf.mxu0
        %v1412 = vadd.f32 0.0, %v1411
        %1413 = vmatmul.bf16.gmra.mxu0 %v804
        %v1414 = vpop.f32.mrf.mxu0
        %v1415 = vadd.f32 0.0, %v1414
        %v1416 = vpop.f32.mrf.mxu0
        %v1417 = vadd.f32 0.0, %v1416
        %1418 = vmatmul.bf16.gmra.mxu0 %v806
        %v1419 = vpop.f32.mrf.mxu0
        %v1420 = vadd.f32 0.0, %v1419
        %v1421 = vpop.f32.mrf.mxu0
        %v1422 = vadd.f32 0.0, %v1421
        %1423 = vmatmul.bf16.gmra.mxu0 %v808
        %v1424 = vpop.f32.mrf.mxu0
        %v1425 = vadd.f32 0.0, %v1424
        %v1426 = vpop.f32.mrf.mxu0
        %v1427 = vadd.f32 0.0, %v1426
        %1428 = vmatmul.bf16.gmra.mxu0 %v810
        %v1429 = vpop.f32.mrf.mxu0
        %v1430 = vadd.f32 0.0, %v1429
        %v1431 = vpop.f32.mrf.mxu0
        %v1432 = vadd.f32 0.0, %v1431
        %1433 = vmatmul.bf16.gmra.mxu0 %v812
        %v1434 = vpop.f32.mrf.mxu0
        %v1435 = vadd.f32 0.0, %v1434
        %v1436 = vpop.f32.mrf.mxu0
        %v1437 = vadd.f32 0.0, %v1436
        %1438 = vdwg.mxu0
        %1439 = vmatpush.bf16.msra.mxu0 %v1288
        %1440 = vmatpush.bf16.msra.mxu0 %v1282
        %1441 = vmatpush.bf16.msra.mxu0 %v1276
        %1442 = vmatpush.bf16.msra.mxu0 %v1270
        %1443 = vmatpush.bf16.msra.mxu0 %v1264
        %1444 = vmatpush.bf16.msra.mxu0 %v1258
        %1445 = vmatpush.bf16.msra.mxu0 %v1252
        %1446 = vmatpush.bf16.msra.mxu0 %v1246
        %1447 = vmatmul.bf16.gmra.mxu0 %v799
        %v1448 = vpop.f32.mrf.mxu0
        %v1449 = vadd.f32 %v1400, %v1448
        %v1450 = vpop.f32.mrf.mxu0
        %v1451 = vadd.f32 %v1402, %v1450
        %1452 = vmatmul.bf16.gmra.mxu0 %v801
        %v1453 = vpop.f32.mrf.mxu0
        %v1454 = vadd.f32 %v1405, %v1453
        %v1455 = vpop.f32.mrf.mxu0
        %v1456 = vadd.f32 %v1407, %v1455
        %1457 = vmatmul.bf16.gmra.mxu0 %v803
        %v1458 = vpop.f32.mrf.mxu0
        %v1459 = vadd.f32 %v1410, %v1458
        %v1460 = vpop.f32.mrf.mxu0
        %v1461 = vadd.f32 %v1412, %v1460
        %1462 = vmatmul.bf16.gmra.mxu0 %v805
        %v1463 = vpop.f32.mrf.mxu0
        %v1464 = vadd.f32 %v1415, %v1463
        %v1465 = vpop.f32.mrf.mxu0
        %v1466 = vadd.f32 %v1417, %v1465
        %1467 = vmatmul.bf16.gmra.mxu0 %v807
        %v1468 = vpop.f32.mrf.mxu0
        %v1469 = vadd.f32 %v1420, %v1468
        %v1470 = vpop.f32.mrf.mxu0
        %v1471 = vadd.f32 %v1422, %v1470
        %1472 = vmatmul.bf16.gmra.mxu0 %v809
        %v1473 = vpop.f32.mrf.mxu0
        %v1474 = vadd.f32 %v1425, %v1473
        %v1475 = vpop.f32.mrf.mxu0
        %v1476 = vadd.f32 %v1427, %v1475
        %1477 = vmatmul.bf16.gmra.mxu0 %v811
        %v1478 = vpop.f32.mrf.mxu0
        %v1479 = vadd.f32 %v1430, %v1478
        %v1480 = vpop.f32.mrf.mxu0
        %v1481 = vadd.f32 %v1432, %v1480
        %1482 = vmatmul.bf16.gmra.mxu0 %v813
        %v1483 = vpop.f32.mrf.mxu0
        %v1484 = vadd.f32 %v1435, %v1483
        %v1485 = vpop.f32.mrf.mxu0
        %v1486 = vadd.f32 %v1437, %v1485
        %1487 = vdwg.mxu0
        %1488 = vmatpush.bf16.msra.mxu0 %v1241
        %1489 = vmatpush.bf16.msra.mxu0 %v1235
        %1490 = vmatpush.bf16.msra.mxu0 %v1229
        %1491 = vmatpush.bf16.msra.mxu0 %v1223
        %1492 = vmatpush.bf16.msra.mxu0 %v1217
        %1493 = vmatpush.bf16.msra.mxu0 %v1211
        %1494 = vmatpush.bf16.msra.mxu0 %v1205
        %1495 = vmatpush.bf16.msra.mxu0 %v1199
        %1496 = vmatmul.bf16.gmra.mxu0 %v798
        %v1497 = vpop.f32.mrf.mxu0
        %v1498 = vadd.f32 0.0, %v1497
        %v1499 = vpop.f32.mrf.mxu0
        %v1500 = vadd.f32 0.0, %v1499
        %1501 = vmatmul.bf16.gmra.mxu0 %v800
        %v1502 = vpop.f32.mrf.mxu0
        %v1503 = vadd.f32 0.0, %v1502
        %v1504 = vpop.f32.mrf.mxu0
        %v1505 = vadd.f32 0.0, %v1504
        %1506 = vmatmul.bf16.gmra.mxu0 %v802
        %v1507 = vpop.f32.mrf.mxu0
        %v1508 = vadd.f32 0.0, %v1507
        %v1509 = vpop.f32.mrf.mxu0
        %v1510 = vadd.f32 0.0, %v1509
        %1511 = vmatmul.bf16.gmra.mxu0 %v804
        %v1512 = vpop.f32.mrf.mxu0
        %v1513 = vadd.f32 0.0, %v1512
        %v1514 = vpop.f32.mrf.mxu0
        %v1515 = vadd.f32 0.0, %v1514
        %1516 = vmatmul.bf16.gmra.mxu0 %v806
        %v1517 = vpop.f32.mrf.mxu0
        %v1518 = vadd.f32 0.0, %v1517
        %v1519 = vpop.f32.mrf.mxu0
        %v1520 = vadd.f32 0.0, %v1519
        %1521 = vmatmul.bf16.gmra.mxu0 %v808
        %v1522 = vpop.f32.mrf.mxu0
        %v1523 = vadd.f32 0.0, %v1522
        %v1524 = vpop.f32.mrf.mxu0
        %v1525 = vadd.f32 0.0, %v1524
        %1526 = vmatmul.bf16.gmra.mxu0 %v810
        %v1527 = vpop.f32.mrf.mxu0
        %v1528 = vadd.f32 0.0, %v1527
        %v1529 = vpop.f32.mrf.mxu0
        %v1530 = vadd.f32 0.0, %v1529
        %1531 = vmatmul.bf16.gmra.mxu0 %v812
        %v1532 = vpop.f32.mrf.mxu0
        %v1533 = vadd.f32 0.0, %v1532
        %v1534 = vpop.f32.mrf.mxu0
        %v1535 = vadd.f32 0.0, %v1534
        %1536 = vdwg.mxu0
        %1537 = vmatpush.bf16.msra.mxu0 %v1289
        %1538 = vmatpush.bf16.msra.mxu0 %v1283
        %1539 = vmatpush.bf16.msra.mxu0 %v1277
        %1540 = vmatpush.bf16.msra.mxu0 %v1271
        %1541 = vmatpush.bf16.msra.mxu0 %v1265
        %1542 = vmatpush.bf16.msra.mxu0 %v1259
        %1543 = vmatpush.bf16.msra.mxu0 %v1253
        %1544 = vmatpush.bf16.msra.mxu0 %v1247
        %1545 = vmatmul.bf16.gmra.mxu0 %v799
        %v1546 = vpop.f32.mrf.mxu0
        %v1547 = vadd.f32 %v1498, %v1546
        %v1548 = vpop.f32.mrf.mxu0
        %v1549 = vadd.f32 %v1500, %v1548
        %1550 = vmatmul.bf16.gmra.mxu0 %v801
        %v1551 = vpop.f32.mrf.mxu0
        %v1552 = vadd.f32 %v1503, %v1551
        %v1553 = vpop.f32.mrf.mxu0
        %v1554 = vadd.f32 %v1505, %v1553
        %1555 = vmatmul.bf16.gmra.mxu0 %v803
        %v1556 = vpop.f32.mrf.mxu0
        %v1557 = vadd.f32 %v1508, %v1556
        %v1558 = vpop.f32.mrf.mxu0
        %v1559 = vadd.f32 %v1510, %v1558
        %1560 = vmatmul.bf16.gmra.mxu0 %v805
        %v1561 = vpop.f32.mrf.mxu0
        %v1562 = vadd.f32 %v1513, %v1561
        %v1563 = vpop.f32.mrf.mxu0
        %v1564 = vadd.f32 %v1515, %v1563
        %1565 = vmatmul.bf16.gmra.mxu0 %v807
        %v1566 = vpop.f32.mrf.mxu0
        %v1567 = vadd.f32 %v1518, %v1566
        %v1568 = vpop.f32.mrf.mxu0
        %v1569 = vadd.f32 %v1520, %v1568
        %1570 = vmatmul.bf16.gmra.mxu0 %v809
        %v1571 = vpop.f32.mrf.mxu0
        %v1572 = vadd.f32 %v1523, %v1571
        %v1573 = vpop.f32.mrf.mxu0
        %v1574 = vadd.f32 %v1525, %v1573
        %1575 = vmatmul.bf16.gmra.mxu0 %v811
        %v1576 = vpop.f32.mrf.mxu0
        %v1577 = vadd.f32 %v1528, %v1576
        %v1578 = vpop.f32.mrf.mxu0
        %v1579 = vadd.f32 %v1530, %v1578
        %1580 = vmatmul.bf16.gmra.mxu0 %v813
        %v1581 = vpop.f32.mrf.mxu0
        %v1582 = vadd.f32 %v1533, %v1581
        %v1583 = vpop.f32.mrf.mxu0
        %v1584 = vadd.f32 %v1535, %v1583
        %1585 = vdwg.mxu0
        %1586 = vmatpush.bf16.msra.mxu0 %v1242
        %1587 = vmatpush.bf16.msra.mxu0 %v1236
        %1588 = vmatpush.bf16.msra.mxu0 %v1230
        %1589 = vmatpush.bf16.msra.mxu0 %v1224
        %1590 = vmatpush.bf16.msra.mxu0 %v1218
        %1591 = vmatpush.bf16.msra.mxu0 %v1212
        %1592 = vmatpush.bf16.msra.mxu0 %v1206
        %1593 = vmatpush.bf16.msra.mxu0 %v1200
        %1594 = vmatmul.bf16.gmra.mxu0 %v798
        %v1595 = vpop.f32.mrf.mxu0
        %v1596 = vadd.f32 0.0, %v1595
        %v1597 = vpop.f32.mrf.mxu0
        %v1598 = vadd.f32 0.0, %v1597
        %1599 = vmatmul.bf16.gmra.mxu0 %v800
        %v1600 = vpop.f32.mrf.mxu0
        %v1601 = vadd.f32 0.0, %v1600
        %v1602 = vpop.f32.mrf.mxu0
        %v1603 = vadd.f32 0.0, %v1602
        %1604 = vmatmul.bf16.gmra.mxu0 %v802
        %v1605 = vpop.f32.mrf.mxu0
        %v1606 = vadd.f32 0.0, %v1605
        %v1607 = vpop.f32.mrf.mxu0
        %v1608 = vadd.f32 0.0, %v1607
        %1609 = vmatmul.bf16.gmra.mxu0 %v804
        %v1610 = vpop.f32.mrf.mxu0
        %v1611 = vadd.f32 0.0, %v1610
        %v1612 = vpop.f32.mrf.mxu0
        %v1613 = vadd.f32 0.0, %v1612
        %1614 = vmatmul.bf16.gmra.mxu0 %v806
        %v1615 = vpop.f32.mrf.mxu0
        %v1616 = vadd.f32 0.0, %v1615
        %v1617 = vpop.f32.mrf.mxu0
        %v1618 = vadd.f32 0.0, %v1617
        %1619 = vmatmul.bf16.gmra.mxu0 %v808
        %v1620 = vpop.f32.mrf.mxu0
        %v1621 = vadd.f32 0.0, %v1620
        %v1622 = vpop.f32.mrf.mxu0
        %v1623 = vadd.f32 0.0, %v1622
        %1624 = vmatmul.bf16.gmra.mxu0 %v810
        %v1625 = vpop.f32.mrf.mxu0
        %v1626 = vadd.f32 0.0, %v1625
        %v1627 = vpop.f32.mrf.mxu0
        %v1628 = vadd.f32 0.0, %v1627
        %1629 = vmatmul.bf16.gmra.mxu0 %v812
        %v1630 = vpop.f32.mrf.mxu0
        %v1631 = vadd.f32 0.0, %v1630
        %v1632 = vpop.f32.mrf.mxu0
        %v1633 = vadd.f32 0.0, %v1632
        %1634 = vdwg.mxu0
        %1635 = vmatpush.bf16.msra.mxu0 %v1290
        %1636 = vmatpush.bf16.msra.mxu0 %v1284
        %1637 = vmatpush.bf16.msra.mxu0 %v1278
        %1638 = vmatpush.bf16.msra.mxu0 %v1272
        %1639 = vmatpush.bf16.msra.mxu0 %v1266
        %1640 = vmatpush.bf16.msra.mxu0 %v1260
        %1641 = vmatpush.bf16.msra.mxu0 %v1254
        %1642 = vmatpush.bf16.msra.mxu0 %v1248
        %1643 = vmatmul.bf16.gmra.mxu0 %v799
        %v1644 = vpop.f32.mrf.mxu0
        %v1645 = vadd.f32 %v1596, %v1644
        %v1646 = vpop.f32.mrf.mxu0
        %v1647 = vadd.f32 %v1598, %v1646
        %1648 = vmatmul.bf16.gmra.mxu0 %v801
        %v1649 = vpop.f32.mrf.mxu0
        %v1650 = vadd.f32 %v1601, %v1649
        %v1651 = vpop.f32.mrf.mxu0
        %v1652 = vadd.f32 %v1603, %v1651
        %1653 = vmatmul.bf16.gmra.mxu0 %v803
        %v1654 = vpop.f32.mrf.mxu0
        %v1655 = vadd.f32 %v1606, %v1654
        %v1656 = vpop.f32.mrf.mxu0
        %v1657 = vadd.f32 %v1608, %v1656
        %1658 = vmatmul.bf16.gmra.mxu0 %v805
        %v1659 = vpop.f32.mrf.mxu0
        %v1660 = vadd.f32 %v1611, %v1659
        %v1661 = vpop.f32.mrf.mxu0
        %v1662 = vadd.f32 %v1613, %v1661
        %1663 = vmatmul.bf16.gmra.mxu0 %v807
        %v1664 = vpop.f32.mrf.mxu0
        %v1665 = vadd.f32 %v1616, %v1664
        %v1666 = vpop.f32.mrf.mxu0
        %v1667 = vadd.f32 %v1618, %v1666
        %1668 = vmatmul.bf16.gmra.mxu0 %v809
        %v1669 = vpop.f32.mrf.mxu0
        %v1670 = vadd.f32 %v1621, %v1669
        %v1671 = vpop.f32.mrf.mxu0
        %v1672 = vadd.f32 %v1623, %v1671
        %1673 = vmatmul.bf16.gmra.mxu0 %v811
        %v1674 = vpop.f32.mrf.mxu0
        %v1675 = vadd.f32 %v1626, %v1674
        %v1676 = vpop.f32.mrf.mxu0
        %v1677 = vadd.f32 %v1628, %v1676
        %1678 = vmatmul.bf16.gmra.mxu0 %v813
        %v1679 = vpop.f32.mrf.mxu0
        %v1680 = vadd.f32 %v1631, %v1679
        %v1681 = vpop.f32.mrf.mxu0
        %v1682 = vadd.f32 %v1633, %v1681
        %1683 = vdwg.mxu0
        %1684 = vmatpush.bf16.msra.mxu0 %v1243
        %1685 = vmatpush.bf16.msra.mxu0 %v1237
        %1686 = vmatpush.bf16.msra.mxu0 %v1231
        %1687 = vmatpush.bf16.msra.mxu0 %v1225
        %1688 = vmatpush.bf16.msra.mxu0 %v1219
        %1689 = vmatpush.bf16.msra.mxu0 %v1213
        %1690 = vmatpush.bf16.msra.mxu0 %v1207
        %1691 = vmatpush.bf16.msra.mxu0 %v1201
        %1692 = vmatmul.bf16.gmra.mxu0 %v798
        %v1693 = vpop.f32.mrf.mxu0
        %v1694 = vadd.f32 0.0, %v1693
        %v1695 = vpop.f32.mrf.mxu0
        %v1696 = vadd.f32 0.0, %v1695
        %1697 = vmatmul.bf16.gmra.mxu0 %v800
        %v1698 = vpop.f32.mrf.mxu0
        %v1699 = vadd.f32 0.0, %v1698
        %v1700 = vpop.f32.mrf.mxu0
        %v1701 = vadd.f32 0.0, %v1700
        %1702 = vmatmul.bf16.gmra.mxu0 %v802
        %v1703 = vpop.f32.mrf.mxu0
        %v1704 = vadd.f32 0.0, %v1703
        %v1705 = vpop.f32.mrf.mxu0
        %v1706 = vadd.f32 0.0, %v1705
        %1707 = vmatmul.bf16.gmra.mxu0 %v804
        %v1708 = vpop.f32.mrf.mxu0
        %v1709 = vadd.f32 0.0, %v1708
        %v1710 = vpop.f32.mrf.mxu0
        %v1711 = vadd.f32 0.0, %v1710
        %1712 = vmatmul.bf16.gmra.mxu0 %v806
        %v1713 = vpop.f32.mrf.mxu0
        %v1714 = vadd.f32 0.0, %v1713
        %v1715 = vpop.f32.mrf.mxu0
        %v1716 = vadd.f32 0.0, %v1715
        %1717 = vmatmul.bf16.gmra.mxu0 %v808
        %v1718 = vpop.f32.mrf.mxu0
        %v1719 = vadd.f32 0.0, %v1718
        %v1720 = vpop.f32.mrf.mxu0
        %v1721 = vadd.f32 0.0, %v1720
        %1722 = vmatmul.bf16.gmra.mxu0 %v810
        %v1723 = vpop.f32.mrf.mxu0
        %v1724 = vadd.f32 0.0, %v1723
        %v1725 = vpop.f32.mrf.mxu0
        %v1726 = vadd.f32 0.0, %v1725
        %1727 = vmatmul.bf16.gmra.mxu0 %v812
        %v1728 = vpop.f32.mrf.mxu0
        %v1729 = vadd.f32 0.0, %v1728
        %v1730 = vpop.f32.mrf.mxu0
        %v1731 = vadd.f32 0.0, %v1730
        %1732 = vdwg.mxu0
        %1733 = vmatpush.bf16.msra.mxu0 %v1291
        %1734 = vmatpush.bf16.msra.mxu0 %v1285
        %1735 = vmatpush.bf16.msra.mxu0 %v1279
        %1736 = vmatpush.bf16.msra.mxu0 %v1273
        %1737 = vmatpush.bf16.msra.mxu0 %v1267
        %1738 = vmatpush.bf16.msra.mxu0 %v1261
        %1739 = vmatpush.bf16.msra.mxu0 %v1255
        %1740 = vmatpush.bf16.msra.mxu0 %v1249
        %1741 = vmatmul.bf16.gmra.mxu0 %v799
        %v1742 = vpop.f32.mrf.mxu0
        %v1743 = vadd.f32 %v1694, %v1742
        %v1744 = vpop.f32.mrf.mxu0
        %v1745 = vadd.f32 %v1696, %v1744
        %1746 = vmatmul.bf16.gmra.mxu0 %v801
        %v1747 = vpop.f32.mrf.mxu0
        %v1748 = vadd.f32 %v1699, %v1747
        %v1749 = vpop.f32.mrf.mxu0
        %v1750 = vadd.f32 %v1701, %v1749
        %1751 = vmatmul.bf16.gmra.mxu0 %v803
        %v1752 = vpop.f32.mrf.mxu0
        %v1753 = vadd.f32 %v1704, %v1752
        %v1754 = vpop.f32.mrf.mxu0
        %v1755 = vadd.f32 %v1706, %v1754
        %1756 = vmatmul.bf16.gmra.mxu0 %v805
        %v1757 = vpop.f32.mrf.mxu0
        %v1758 = vadd.f32 %v1709, %v1757
        %v1759 = vpop.f32.mrf.mxu0
        %v1760 = vadd.f32 %v1711, %v1759
        %1761 = vmatmul.bf16.gmra.mxu0 %v807
        %v1762 = vpop.f32.mrf.mxu0
        %v1763 = vadd.f32 %v1714, %v1762
        %v1764 = vpop.f32.mrf.mxu0
        %v1765 = vadd.f32 %v1716, %v1764
        %1766 = vmatmul.bf16.gmra.mxu0 %v809
        %v1767 = vpop.f32.mrf.mxu0
        %v1768 = vadd.f32 %v1719, %v1767
        %v1769 = vpop.f32.mrf.mxu0
        %v1770 = vadd.f32 %v1721, %v1769
        %1771 = vmatmul.bf16.gmra.mxu0 %v811
        %v1772 = vpop.f32.mrf.mxu0
        %v1773 = vadd.f32 %v1724, %v1772
        %v1774 = vpop.f32.mrf.mxu0
        %v1775 = vadd.f32 %v1726, %v1774
        %1776 = vmatmul.bf16.gmra.mxu0 %v813
        %v1777 = vpop.f32.mrf.mxu0
        %v1778 = vadd.f32 %v1729, %v1777
        %v1779 = vpop.f32.mrf.mxu0
        %v1780 = vadd.f32 %v1731, %v1779
        %1781 = vdwg.mxu0
        %1782 = vmatpush.bf16.msra.mxu0 %v1244
        %1783 = vmatpush.bf16.msra.mxu0 %v1238
        %1784 = vmatpush.bf16.msra.mxu0 %v1232
        %1785 = vmatpush.bf16.msra.mxu0 %v1226
        %1786 = vmatpush.bf16.msra.mxu0 %v1220
        %1787 = vmatpush.bf16.msra.mxu0 %v1214
        %1788 = vmatpush.bf16.msra.mxu0 %v1208
        %1789 = vmatpush.bf16.msra.mxu0 %v1202
        %1790 = vmatmul.bf16.gmra.mxu0 %v798
        %v1791 = vpop.f32.mrf.mxu0
        %v1792 = vadd.f32 0.0, %v1791
        %v1793 = vpop.f32.mrf.mxu0
        %v1794 = vadd.f32 0.0, %v1793
        %1795 = vmatmul.bf16.gmra.mxu0 %v800
        %v1796 = vpop.f32.mrf.mxu0
        %v1797 = vadd.f32 0.0, %v1796
        %v1798 = vpop.f32.mrf.mxu0
        %v1799 = vadd.f32 0.0, %v1798
        %1800 = vmatmul.bf16.gmra.mxu0 %v802
        %v1801 = vpop.f32.mrf.mxu0
        %v1802 = vadd.f32 0.0, %v1801
        %v1803 = vpop.f32.mrf.mxu0
        %v1804 = vadd.f32 0.0, %v1803
        %1805 = vmatmul.bf16.gmra.mxu0 %v804
        %v1806 = vpop.f32.mrf.mxu0
        %v1807 = vadd.f32 0.0, %v1806
        %v1808 = vpop.f32.mrf.mxu0
        %v1809 = vadd.f32 0.0, %v1808
        %1810 = vmatmul.bf16.gmra.mxu0 %v806
        %v1811 = vpop.f32.mrf.mxu0
        %v1812 = vadd.f32 0.0, %v1811
        %v1813 = vpop.f32.mrf.mxu0
        %v1814 = vadd.f32 0.0, %v1813
        %1815 = vmatmul.bf16.gmra.mxu0 %v808
        %v1816 = vpop.f32.mrf.mxu0
        %v1817 = vadd.f32 0.0, %v1816
        %v1818 = vpop.f32.mrf.mxu0
        %v1819 = vadd.f32 0.0, %v1818
        %1820 = vmatmul.bf16.gmra.mxu0 %v810
        %v1821 = vpop.f32.mrf.mxu0
        %v1822 = vadd.f32 0.0, %v1821
        %v1823 = vpop.f32.mrf.mxu0
        %v1824 = vadd.f32 0.0, %v1823
        %1825 = vmatmul.bf16.gmra.mxu0 %v812
        %v1826 = vpop.f32.mrf.mxu0
        %v1827 = vadd.f32 0.0, %v1826
        %v1828 = vpop.f32.mrf.mxu0
        %v1829 = vadd.f32 0.0, %v1828
        %1830 = vdwg.mxu0
        %1831 = vmatpush.bf16.msra.mxu0 %v1292
        %1832 = vmatpush.bf16.msra.mxu0 %v1286
        %1833 = vmatpush.bf16.msra.mxu0 %v1280
        %1834 = vmatpush.bf16.msra.mxu0 %v1274
        %1835 = vmatpush.bf16.msra.mxu0 %v1268
        %1836 = vmatpush.bf16.msra.mxu0 %v1262
        %1837 = vmatpush.bf16.msra.mxu0 %v1256
        %1838 = vmatpush.bf16.msra.mxu0 %v1250
        %1839 = vmatmul.bf16.gmra.mxu0 %v799
        %v1840 = vpop.f32.mrf.mxu0
        %v1841 = vadd.f32 %v1792, %v1840
        %v1842 = vpop.f32.mrf.mxu0
        %v1843 = vadd.f32 %v1794, %v1842
        %1844 = vmatmul.bf16.gmra.mxu0 %v801
        %v1845 = vpop.f32.mrf.mxu0
        %v1846 = vadd.f32 %v1797, %v1845
        %v1847 = vpop.f32.mrf.mxu0
        %v1848 = vadd.f32 %v1799, %v1847
        %1849 = vmatmul.bf16.gmra.mxu0 %v803
        %v1850 = vpop.f32.mrf.mxu0
        %v1851 = vadd.f32 %v1802, %v1850
        %v1852 = vpop.f32.mrf.mxu0
        %v1853 = vadd.f32 %v1804, %v1852
        %1854 = vmatmul.bf16.gmra.mxu0 %v805
        %v1855 = vpop.f32.mrf.mxu0
        %v1856 = vadd.f32 %v1807, %v1855
        %v1857 = vpop.f32.mrf.mxu0
        %v1858 = vadd.f32 %v1809, %v1857
        %1859 = vmatmul.bf16.gmra.mxu0 %v807
        %v1860 = vpop.f32.mrf.mxu0
        %v1861 = vadd.f32 %v1812, %v1860
        %v1862 = vpop.f32.mrf.mxu0
        %v1863 = vadd.f32 %v1814, %v1862
        %1864 = vmatmul.bf16.gmra.mxu0 %v809
        %v1865 = vpop.f32.mrf.mxu0
        %v1866 = vadd.f32 %v1817, %v1865
        %v1867 = vpop.f32.mrf.mxu0
        %v1868 = vadd.f32 %v1819, %v1867
        %1869 = vmatmul.bf16.gmra.mxu0 %v811
        %v1870 = vpop.f32.mrf.mxu0
        %v1871 = vadd.f32 %v1822, %v1870
        %v1872 = vpop.f32.mrf.mxu0
        %v1873 = vadd.f32 %v1824, %v1872
        %1874 = vmatmul.bf16.gmra.mxu0 %v813
        %v1875 = vpop.f32.mrf.mxu0
        %v1876 = vadd.f32 %v1827, %v1875
        %v1877 = vpop.f32.mrf.mxu0
        %v1878 = vadd.f32 %v1829, %v1877
        %1879 = vdwg.mxu0
        %1880 = vmatpush.bf16.msra.mxu0 %v1245
        %1881 = vmatpush.bf16.msra.mxu0 %v1239
        %1882 = vmatpush.bf16.msra.mxu0 %v1233
        %1883 = vmatpush.bf16.msra.mxu0 %v1227
        %1884 = vmatpush.bf16.msra.mxu0 %v1221
        %1885 = vmatpush.bf16.msra.mxu0 %v1215
        %1886 = vmatpush.bf16.msra.mxu0 %v1209
        %1887 = vmatpush.bf16.msra.mxu0 %v1203
        %1888 = vmatmul.bf16.gmra.mxu0 %v798
        %v1889 = vpop.f32.mrf.mxu0
        %v1890 = vadd.f32 0.0, %v1889
        %v1891 = vpop.f32.mrf.mxu0
        %v1892 = vadd.f32 0.0, %v1891
        %1893 = vmatmul.bf16.gmra.mxu0 %v800
        %v1894 = vpop.f32.mrf.mxu0
        %v1895 = vadd.f32 0.0, %v1894
        %v1896 = vpop.f32.mrf.mxu0
        %v1897 = vadd.f32 0.0, %v1896
        %1898 = vmatmul.bf16.gmra.mxu0 %v802
        %v1899 = vpop.f32.mrf.mxu0
        %v1900 = vadd.f32 0.0, %v1899
        %v1901 = vpop.f32.mrf.mxu0
        %v1902 = vadd.f32 0.0, %v1901
        %1903 = vmatmul.bf16.gmra.mxu0 %v804
        %v1904 = vpop.f32.mrf.mxu0
        %v1905 = vadd.f32 0.0, %v1904
        %v1906 = vpop.f32.mrf.mxu0
        %v1907 = vadd.f32 0.0, %v1906
        %1908 = vmatmul.bf16.gmra.mxu0 %v806
        %v1909 = vpop.f32.mrf.mxu0
        %v1910 = vadd.f32 0.0, %v1909
        %v1911 = vpop.f32.mrf.mxu0
        %v1912 = vadd.f32 0.0, %v1911
        %1913 = vmatmul.bf16.gmra.mxu0 %v808
        %v1914 = vpop.f32.mrf.mxu0
        %v1915 = vadd.f32 0.0, %v1914
        %v1916 = vpop.f32.mrf.mxu0
        %v1917 = vadd.f32 0.0, %v1916
        %1918 = vmatmul.bf16.gmra.mxu0 %v810
        %v1919 = vpop.f32.mrf.mxu0
        %v1920 = vadd.f32 0.0, %v1919
        %v1921 = vpop.f32.mrf.mxu0
        %v1922 = vadd.f32 0.0, %v1921
        %1923 = vmatmul.bf16.gmra.mxu0 %v812
        %v1924 = vpop.f32.mrf.mxu0
        %v1925 = vadd.f32 0.0, %v1924
        %v1926 = vpop.f32.mrf.mxu0
        %v1927 = vadd.f32 0.0, %v1926
        %1928 = vdwg.mxu0
        %1929 = vmatpush.bf16.msra.mxu0 %v1293
        %1930 = vmatpush.bf16.msra.mxu0 %v1287
        %1931 = vmatpush.bf16.msra.mxu0 %v1281
        %1932 = vmatpush.bf16.msra.mxu0 %v1275
        %1933 = vmatpush.bf16.msra.mxu0 %v1269
        %1934 = vmatpush.bf16.msra.mxu0 %v1263
        %1935 = vmatpush.bf16.msra.mxu0 %v1257
        %1936 = vmatpush.bf16.msra.mxu0 %v1251
        %1937 = vmatmul.bf16.gmra.mxu0 %v799
        %v1938 = vpop.f32.mrf.mxu0
        %v1939 = vadd.f32 %v1890, %v1938
        %v1940 = vpop.f32.mrf.mxu0
        %v1941 = vadd.f32 %v1892, %v1940
        %1942 = vmatmul.bf16.gmra.mxu0 %v801
        %v1943 = vpop.f32.mrf.mxu0
        %v1944 = vadd.f32 %v1895, %v1943
        %v1945 = vpop.f32.mrf.mxu0
        %v1946 = vadd.f32 %v1897, %v1945
        %1947 = vmatmul.bf16.gmra.mxu0 %v803
        %v1948 = vpop.f32.mrf.mxu0
        %v1949 = vadd.f32 %v1900, %v1948
        %v1950 = vpop.f32.mrf.mxu0
        %v1951 = vadd.f32 %v1902, %v1950
        %1952 = vmatmul.bf16.gmra.mxu0 %v805
        %v1953 = vpop.f32.mrf.mxu0
        %v1954 = vadd.f32 %v1905, %v1953
        %v1955 = vpop.f32.mrf.mxu0
        %v1956 = vadd.f32 %v1907, %v1955
        %1957 = vmatmul.bf16.gmra.mxu0 %v807
        %v1958 = vpop.f32.mrf.mxu0
        %v1959 = vadd.f32 %v1910, %v1958
        %v1960 = vpop.f32.mrf.mxu0
        %v1961 = vadd.f32 %v1912, %v1960
        %1962 = vmatmul.bf16.gmra.mxu0 %v809
        %v1963 = vpop.f32.mrf.mxu0
        %v1964 = vadd.f32 %v1915, %v1963
        %v1965 = vpop.f32.mrf.mxu0
        %v1966 = vadd.f32 %v1917, %v1965
        %1967 = vmatmul.bf16.gmra.mxu0 %v811
        %v1968 = vpop.f32.mrf.mxu0
        %v1969 = vadd.f32 %v1920, %v1968
        %v1970 = vpop.f32.mrf.mxu0
        %v1971 = vadd.f32 %v1922, %v1970
        %1972 = vmatmul.bf16.gmra.mxu0 %v813
        %v1973 = vpop.f32.mrf.mxu0
        %v1974 = vadd.f32 %v1925, %v1973
        %v1975 = vpop.f32.mrf.mxu0
        %v1976 = vadd.f32 %v1927, %v1975
        %1977 = vdwg.mxu0
        %v1978 = vpack.c.bf16 %v1449, %v1449
        %v1979 = vpack.c.bf16 %v1451, %v1451
        %v1980 = vpack.c.bf16 %v1454, %v1454
        %v1981 = vpack.c.bf16 %v1456, %v1456
        %v1982 = vpack.c.bf16 %v1459, %v1459
        %v1983 = vpack.c.bf16 %v1461, %v1461
        %v1984 = vpack.c.bf16 %v1464, %v1464
        %v1985 = vpack.c.bf16 %v1466, %v1466
        %v1986 = vpack.c.bf16 %v1469, %v1469
        %v1987 = vpack.c.bf16 %v1471, %v1471
        %v1988 = vpack.c.bf16 %v1474, %v1474
        %v1989 = vpack.c.bf16 %v1476, %v1476
        %v1990 = vpack.c.bf16 %v1479, %v1479
        %v1991 = vpack.c.bf16 %v1481, %v1481
        %v1992 = vpack.c.bf16 %v1484, %v1484
        %v1993 = vpack.c.bf16 %v1486, %v1486
        %1994 = vst [vmem:[%s302] sm:$0xf] %v1978
        %1995 = vst [vmem:[%s302 + $0x4] sm:$0xf] %v1979
        %1996 = vst [vmem:[%s302 + $0x8] sm:$0xf] %v1980
        %1997 = vst [vmem:[%s302 + $0xc] sm:$0xf] %v1981
        %1998 = vst [vmem:[%s302 + $0x10] sm:$0xf] %v1982
        %1999 = vst [vmem:[%s302 + $0x14] sm:$0xf] %v1983
        %2000 = vst [vmem:[%s302 + $0x18] sm:$0xf] %v1984
        %2001 = vst [vmem:[%s302 + $0x1c] sm:$0xf] %v1985
        %2002 = vst [vmem:[%s302 + $0x20] sm:$0xf] %v1986
        %2003 = vst [vmem:[%s302 + $0x24] sm:$0xf] %v1987
        %2004 = vst [vmem:[%s302 + $0x28] sm:$0xf] %v1988
        %2005 = vst [vmem:[%s302 + $0x2c] sm:$0xf] %v1989
        %2006 = vst [vmem:[%s302 + $0x30] sm:$0xf] %v1990
        %2007 = vst [vmem:[%s302 + $0x34] sm:$0xf] %v1991
        %2008 = vst [vmem:[%s302 + $0x38] sm:$0xf] %v1992
        %2009 = vst [vmem:[%s302 + $0x3c] sm:$0xf] %v1993
        %v2010 = vpack.c.bf16 %v1645, %v1645
        %v2011 = vpack.c.bf16 %v1647, %v1647
        %v2012 = vpack.c.bf16 %v1650, %v1650
        %v2013 = vpack.c.bf16 %v1652, %v1652
        %v2014 = vpack.c.bf16 %v1655, %v1655
        %v2015 = vpack.c.bf16 %v1657, %v1657
        %v2016 = vpack.c.bf16 %v1660, %v1660
        %v2017 = vpack.c.bf16 %v1662, %v1662
        %v2018 = vpack.c.bf16 %v1665, %v1665
        %v2019 = vpack.c.bf16 %v1667, %v1667
        %v2020 = vpack.c.bf16 %v1670, %v1670
        %v2021 = vpack.c.bf16 %v1672, %v1672
        %v2022 = vpack.c.bf16 %v1675, %v1675
        %v2023 = vpack.c.bf16 %v1677, %v1677
        %v2024 = vpack.c.bf16 %v1680, %v1680
        %v2025 = vpack.c.bf16 %v1682, %v1682
        %2026 = vst [vmem:[%s309] sm:$0xf] %v2010
        %2027 = vst [vmem:[%s309 + $0x4] sm:$0xf] %v2011
        %2028 = vst [vmem:[%s309 + $0x8] sm:$0xf] %v2012
        %2029 = vst [vmem:[%s309 + $0xc] sm:$0xf] %v2013
        %2030 = vst [vmem:[%s309 + $0x10] sm:$0xf] %v2014
        %2031 = vst [vmem:[%s309 + $0x14] sm:$0xf] %v2015
        %2032 = vst [vmem:[%s309 + $0x18] sm:$0xf] %v2016
        %2033 = vst [vmem:[%s309 + $0x1c] sm:$0xf] %v2017
        %2034 = vst [vmem:[%s309 + $0x20] sm:$0xf] %v2018
        %2035 = vst [vmem:[%s309 + $0x24] sm:$0xf] %v2019
        %2036 = vst [vmem:[%s309 + $0x28] sm:$0xf] %v2020
        %2037 = vst [vmem:[%s309 + $0x2c] sm:$0xf] %v2021
        %2038 = vst [vmem:[%s309 + $0x30] sm:$0xf] %v2022
        %2039 = vst [vmem:[%s309 + $0x34] sm:$0xf] %v2023
        %2040 = vst [vmem:[%s309 + $0x38] sm:$0xf] %v2024
        %2041 = vst [vmem:[%s309 + $0x3c] sm:$0xf] %v2025
        %v2042 = vpack.c.bf16 %v1841, %v1841
        %v2043 = vpack.c.bf16 %v1843, %v1843
        %v2044 = vpack.c.bf16 %v1846, %v1846
        %v2045 = vpack.c.bf16 %v1848, %v1848
        %v2046 = vpack.c.bf16 %v1851, %v1851
        %v2047 = vpack.c.bf16 %v1853, %v1853
        %v2048 = vpack.c.bf16 %v1856, %v1856
        %v2049 = vpack.c.bf16 %v1858, %v1858
        %v2050 = vpack.c.bf16 %v1861, %v1861
        %v2051 = vpack.c.bf16 %v1863, %v1863
        %v2052 = vpack.c.bf16 %v1866, %v1866
        %v2053 = vpack.c.bf16 %v1868, %v1868
        %v2054 = vpack.c.bf16 %v1871, %v1871
        %v2055 = vpack.c.bf16 %v1873, %v1873
        %v2056 = vpack.c.bf16 %v1876, %v1876
        %v2057 = vpack.c.bf16 %v1878, %v1878
        %2058 = vst [vmem:[%s316] sm:$0xf] %v2042
        %2059 = vst [vmem:[%s316 + $0x4] sm:$0xf] %v2043
        %2060 = vst [vmem:[%s316 + $0x8] sm:$0xf] %v2044
        %2061 = vst [vmem:[%s316 + $0xc] sm:$0xf] %v2045
        %2062 = vst [vmem:[%s316 + $0x10] sm:$0xf] %v2046
        %2063 = vst [vmem:[%s316 + $0x14] sm:$0xf] %v2047
        %2064 = vst [vmem:[%s316 + $0x18] sm:$0xf] %v2048
        %2065 = vst [vmem:[%s316 + $0x1c] sm:$0xf] %v2049
        %2066 = vst [vmem:[%s316 + $0x20] sm:$0xf] %v2050
        %2067 = vst [vmem:[%s316 + $0x24] sm:$0xf] %v2051
        %2068 = vst [vmem:[%s316 + $0x28] sm:$0xf] %v2052
        %2069 = vst [vmem:[%s316 + $0x2c] sm:$0xf] %v2053
        %2070 = vst [vmem:[%s316 + $0x30] sm:$0xf] %v2054
        %2071 = vst [vmem:[%s316 + $0x34] sm:$0xf] %v2055
        %2072 = vst [vmem:[%s316 + $0x38] sm:$0xf] %v2056
        %2073 = vst [vmem:[%s316 + $0x3c] sm:$0xf] %v2057
        %v2074 = vpack.c.bf16 %v1547, %v1547
        %v2075 = vpack.c.bf16 %v1549, %v1549
        %v2076 = vpack.c.bf16 %v1552, %v1552
        %v2077 = vpack.c.bf16 %v1554, %v1554
        %v2078 = vpack.c.bf16 %v1557, %v1557
        %v2079 = vpack.c.bf16 %v1559, %v1559
        %v2080 = vpack.c.bf16 %v1562, %v1562
        %v2081 = vpack.c.bf16 %v1564, %v1564
        %v2082 = vpack.c.bf16 %v1567, %v1567
        %v2083 = vpack.c.bf16 %v1569, %v1569
        %v2084 = vpack.c.bf16 %v1572, %v1572
        %v2085 = vpack.c.bf16 %v1574, %v1574
        %v2086 = vpack.c.bf16 %v1577, %v1577
        %v2087 = vpack.c.bf16 %v1579, %v1579
        %v2088 = vpack.c.bf16 %v1582, %v1582
        %v2089 = vpack.c.bf16 %v1584, %v1584
        %s2090 = scalar_lea.vmem %s302, 64 [#allocation8]
        %2091 = vst [vmem:[%s2090] sm:$0xf] %v2074
        %2092 = vst [vmem:[%s2090 + $0x4] sm:$0xf] %v2075
        %2093 = vst [vmem:[%s2090 + $0x8] sm:$0xf] %v2076
        %2094 = vst [vmem:[%s2090 + $0xc] sm:$0xf] %v2077
        %2095 = vst [vmem:[%s2090 + $0x10] sm:$0xf] %v2078
        %2096 = vst [vmem:[%s2090 + $0x14] sm:$0xf] %v2079
        %2097 = vst [vmem:[%s2090 + $0x18] sm:$0xf] %v2080
        %2098 = vst [vmem:[%s2090 + $0x1c] sm:$0xf] %v2081
        %2099 = vst [vmem:[%s2090 + $0x20] sm:$0xf] %v2082
        %2100 = vst [vmem:[%s2090 + $0x24] sm:$0xf] %v2083
        %2101 = vst [vmem:[%s2090 + $0x28] sm:$0xf] %v2084
        %2102 = vst [vmem:[%s2090 + $0x2c] sm:$0xf] %v2085
        %2103 = vst [vmem:[%s2090 + $0x30] sm:$0xf] %v2086
        %2104 = vst [vmem:[%s2090 + $0x34] sm:$0xf] %v2087
        %2105 = vst [vmem:[%s2090 + $0x38] sm:$0xf] %v2088
        %2106 = vst [vmem:[%s2090 + $0x3c] sm:$0xf] %v2089
        %v2107 = vpack.c.bf16 %v1743, %v1743
        %v2108 = vpack.c.bf16 %v1745, %v1745
        %v2109 = vpack.c.bf16 %v1748, %v1748
        %v2110 = vpack.c.bf16 %v1750, %v1750
        %v2111 = vpack.c.bf16 %v1753, %v1753
        %v2112 = vpack.c.bf16 %v1755, %v1755
        %v2113 = vpack.c.bf16 %v1758, %v1758
        %v2114 = vpack.c.bf16 %v1760, %v1760
        %v2115 = vpack.c.bf16 %v1763, %v1763
        %v2116 = vpack.c.bf16 %v1765, %v1765
        %v2117 = vpack.c.bf16 %v1768, %v1768
        %v2118 = vpack.c.bf16 %v1770, %v1770
        %v2119 = vpack.c.bf16 %v1773, %v1773
        %v2120 = vpack.c.bf16 %v1775, %v1775
        %v2121 = vpack.c.bf16 %v1778, %v1778
        %v2122 = vpack.c.bf16 %v1780, %v1780
        %s2123 = scalar_lea.vmem %s309, 64 [#allocation9]
        %2124 = vst [vmem:[%s2123] sm:$0xf] %v2107
        %2125 = vst [vmem:[%s2123 + $0x4] sm:$0xf] %v2108
        %2126 = vst [vmem:[%s2123 + $0x8] sm:$0xf] %v2109
        %2127 = vst [vmem:[%s2123 + $0xc] sm:$0xf] %v2110
        %2128 = vst [vmem:[%s2123 + $0x10] sm:$0xf] %v2111
        %2129 = vst [vmem:[%s2123 + $0x14] sm:$0xf] %v2112
        %2130 = vst [vmem:[%s2123 + $0x18] sm:$0xf] %v2113
        %2131 = vst [vmem:[%s2123 + $0x1c] sm:$0xf] %v2114
        %2132 = vst [vmem:[%s2123 + $0x20] sm:$0xf] %v2115
        %2133 = vst [vmem:[%s2123 + $0x24] sm:$0xf] %v2116
        %2134 = vst [vmem:[%s2123 + $0x28] sm:$0xf] %v2117
        %2135 = vst [vmem:[%s2123 + $0x2c] sm:$0xf] %v2118
        %2136 = vst [vmem:[%s2123 + $0x30] sm:$0xf] %v2119
        %2137 = vst [vmem:[%s2123 + $0x34] sm:$0xf] %v2120
        %2138 = vst [vmem:[%s2123 + $0x38] sm:$0xf] %v2121
        %2139 = vst [vmem:[%s2123 + $0x3c] sm:$0xf] %v2122
        %v2140 = vpack.c.bf16 %v1939, %v1939
        %v2141 = vpack.c.bf16 %v1941, %v1941
        %v2142 = vpack.c.bf16 %v1944, %v1944
        %v2143 = vpack.c.bf16 %v1946, %v1946
        %v2144 = vpack.c.bf16 %v1949, %v1949
        %v2145 = vpack.c.bf16 %v1951, %v1951
        %v2146 = vpack.c.bf16 %v1954, %v1954
        %v2147 = vpack.c.bf16 %v1956, %v1956
        %v2148 = vpack.c.bf16 %v1959, %v1959
        %v2149 = vpack.c.bf16 %v1961, %v1961
        %v2150 = vpack.c.bf16 %v1964, %v1964
        %v2151 = vpack.c.bf16 %v1966, %v1966
        %v2152 = vpack.c.bf16 %v1969, %v1969
        %v2153 = vpack.c.bf16 %v1971, %v1971
        %v2154 = vpack.c.bf16 %v1974, %v1974
        %v2155 = vpack.c.bf16 %v1976, %v1976
        %s2156 = scalar_lea.vmem %s316, 64 [#allocation11]
        %2157 = vst [vmem:[%s2156] sm:$0xf] %v2140
        %2158 = vst [vmem:[%s2156 + $0x4] sm:$0xf] %v2141
        %2159 = vst [vmem:[%s2156 + $0x8] sm:$0xf] %v2142
        %2160 = vst [vmem:[%s2156 + $0xc] sm:$0xf] %v2143
        %2161 = vst [vmem:[%s2156 + $0x10] sm:$0xf] %v2144
        %2162 = vst [vmem:[%s2156 + $0x14] sm:$0xf] %v2145
        %2163 = vst [vmem:[%s2156 + $0x18] sm:$0xf] %v2146
        %2164 = vst [vmem:[%s2156 + $0x1c] sm:$0xf] %v2147
        %2165 = vst [vmem:[%s2156 + $0x20] sm:$0xf] %v2148
        %2166 = vst [vmem:[%s2156 + $0x24] sm:$0xf] %v2149
        %2167 = vst [vmem:[%s2156 + $0x28] sm:$0xf] %v2150
        %2168 = vst [vmem:[%s2156 + $0x2c] sm:$0xf] %v2151
        %2169 = vst [vmem:[%s2156 + $0x30] sm:$0xf] %v2152
        %2170 = vst [vmem:[%s2156 + $0x34] sm:$0xf] %v2153
        %2171 = vst [vmem:[%s2156 + $0x38] sm:$0xf] %v2154
        %2172 = vst [vmem:[%s2156 + $0x3c] sm:$0xf] %v2155
        %s2173 = sand.u32 %s119, 1
        %s2174 = scalar_lea.sflag [#allocation4], %s2173
        %s2175 = sand.u32 %s119, 1
        %s2176 = smul.addr %s2175, 128
        %s2177 = scalar_lea.vmem [#allocation8], %s2176
        %s2178 = sand.u32 %s27, 1
        %s2179 = scalar_lea.sflag [#allocation10], %s2178
        %s2180 = sand.u32 %s147, 1
        %s2181 = smul.addr %s2180, 128
        %s2182 = scalar_lea.vmem [#allocation9], %s2181
        %s2183 = sand.u32 %s27, 1
        %s2184 = scalar_lea.sflag [#allocation10], %s2183
        %s2185 = sand.u32 %s175, 1
        %s2186 = smul.addr %s2185, 128
        %s2187 = scalar_lea.vmem [#allocation11], %s2186
        // Predicated region
        $region45: #{tpu_custom_call.1} parent=31 // pred_check
          %p2188 = pneg %p129
        $region46: #{tpu_custom_call.1} parent=31 // pred_check_branch
          %2190 = sbr.rel (%p2188) target = $region48
        $region47: #{tpu_custom_call.1} parent=31 // pred_region
          %s2191 = smul.u32 16, %s32
          %2193 = vsyncadd %s2174, 0
          %s2194 = smul.addr %s31, 32
          %s2195 = sadd.s32 %s2191, %s2194
          %s2196 = smul.addr %s2195, 4
          %s2197 = scalar_lea.hbm %s3, %s2196
          %s2198 = sshll.u32 %s2177, 4
          %s2199 = int_to_ptr.vmem [resolvable:$true] %s2198
          %s2200 = sshll.u32 %s2197, 4
          %s2201 = int_to_ptr.hbm [resolvable:$true] %s2200
          %2206 = dma.vmem_to_hbm [thread:$0]  %s2199, 2048, %s2201, %s2174, 64, 64, 4
        $region48: #{tpu_custom_call.1} parent=31 // pred_fallthru
          _
        // Predicated region
        $region49: #{tpu_custom_call.1} parent=31 // pred_check
          %p2207 = pneg %p157
        $region50: #{tpu_custom_call.1} parent=31 // pred_check_branch
          %2209 = sbr.rel (%p2207) target = $region52
        $region51: #{tpu_custom_call.1} parent=31 // pred_region
          %s2210 = smul.u32 16, %s32
          %2212 = vsyncadd %s2179, 0
          %s2213 = smul.addr %s31, 32
          %s2214 = sadd.s32 %s2210, %s2213
          %s2215 = smul.addr %s2214, 4
          %s2216 = scalar_lea.hbm %s4, %s2215
          %s2217 = sshll.u32 %s2182, 4
          %s2218 = int_to_ptr.vmem [resolvable:$true] %s2217
          %s2219 = sshll.u32 %s2216, 4
          %s2220 = int_to_ptr.hbm [resolvable:$true] %s2219
          %2225 = dma.vmem_to_hbm [thread:$0]  %s2218, 2048, %s2220, %s2179, 64, 64, 4
        $region52: #{tpu_custom_call.1} parent=31 // pred_fallthru
          _
        // Predicated region
        $region53: #{tpu_custom_call.1} parent=31 // pred_check
          %p2226 = pneg %p185
        $region54: #{tpu_custom_call.1} parent=31 // pred_check_branch
          %2228 = sbr.rel (%p2226) target = $region56
        $region55: #{tpu_custom_call.1} parent=31 // pred_region
          %s2229 = smul.u32 16, %s32
          %2231 = vsyncadd %s2184, 0
          %s2232 = smul.addr %s31, 32
          %s2233 = sadd.s32 %s2229, %s2232
          %s2234 = smul.addr %s2233, 4
          %s2235 = scalar_lea.hbm %s5, %s2234
          %s2236 = sshll.u32 %s2187, 4
          %s2237 = int_to_ptr.vmem [resolvable:$true] %s2236
          %s2238 = sshll.u32 %s2235, 4
          %s2239 = int_to_ptr.hbm [resolvable:$true] %s2238
          %2244 = dma.vmem_to_hbm [thread:$0]  %s2237, 2048, %s2239, %s2184, 64, 64, 4
        $region56: #{tpu_custom_call.1} parent=31 // pred_fallthru
          _
      $region32: #{tpu_custom_call.1} parent=5 // pred_fallthru
        _
      %p2245 = scmp.le.s32.totalorder 2, %s22
      // Predicated region
      $region57: #{tpu_custom_call.1} parent=5 // pred_check
        %p2246 = pneg %p2245
      $region58: #{tpu_custom_call.1} parent=5 // pred_check_branch
        %2248 = sbr.rel (%p2246) target = $region60
      $region59: #{tpu_custom_call.1} parent=5 // pred_region
        %s2249 = ssub.s32 %s22, 2
        // Predicated region
        $region61: #{tpu_custom_call.1} parent=59 // pred_check
          %p2250 = pneg %p135
        $region62: #{tpu_custom_call.1} parent=59 // pred_check_branch
          %2252 = sbr.rel (%p2250) target = $region64
        $region63: #{tpu_custom_call.1} parent=59 // pred_region
          %s2253 = sand.u32 %s120, 1
          %s2254 = scalar_lea.sflag [#allocation4], %s2253
          %s2255 = sand.u32 %s120, 1
          %s2256 = smul.addr %s2255, 128
          %s2257 = scalar_lea.vmem [#allocation8], %s2256
          %2259 = dma.done %s2254, 2048
        $region64: #{tpu_custom_call.1} parent=59 // pred_fallthru
          _
        // Predicated region
        $region65: #{tpu_custom_call.1} parent=59 // pred_check
          %p2260 = pneg %p163
        $region66: #{tpu_custom_call.1} parent=59 // pred_check_branch
          %2262 = sbr.rel (%p2260) target = $region68
        $region67: #{tpu_custom_call.1} parent=59 // pred_region
          %s2263 = sand.u32 %s28, 1
          %s2264 = scalar_lea.sflag [#allocation10], %s2263
          %s2265 = sand.u32 %s148, 1
          %s2266 = smul.addr %s2265, 128
          %s2267 = scalar_lea.vmem [#allocation9], %s2266
          %2269 = dma.done %s2264, 2048
        $region68: #{tpu_custom_call.1} parent=59 // pred_fallthru
          _
        // Predicated region
        $region69: #{tpu_custom_call.1} parent=59 // pred_check
          %p2270 = pneg %p191
        $region70: #{tpu_custom_call.1} parent=59 // pred_check_branch
          %2272 = sbr.rel (%p2270) target = $region72
        $region71: #{tpu_custom_call.1} parent=59 // pred_region
          %s2273 = sand.u32 %s28, 1
          %s2274 = scalar_lea.sflag [#allocation10], %s2273
          %s2275 = sand.u32 %s176, 1
          %s2276 = smul.addr %s2275, 128
          %s2277 = scalar_lea.vmem [#allocation11], %s2276
          %2279 = dma.done %s2274, 2048
        $region72: #{tpu_custom_call.1} parent=59 // pred_fallthru
          _
      $region60: #{tpu_custom_call.1} parent=5 // pred_fallthru
        _
    $region6: #{tpu_custom_call.1} parent=1 // loop_footer
      %s26 = sadd.s32 1, %s22
    $region7: #{tpu_custom_call.1} parent=1 // loop_footer_branch
      %21 = sbr.rel target = $region3
    $region8: #{tpu_custom_call.1} parent=1 // loop_exit
      _
    %2280 = vsyncpa [#allocation3], 1
    %s2281 = scalar_lea.sflag [#allocation3], 1
    %2282 = vsyncpa %s2281, 1
    %2283 = vsyncpa [#allocation6], 1
    %2284 = vsyncpa [#allocation4], 1
    %s2285 = scalar_lea.sflag [#allocation4], 1
    %2286 = vsyncpa %s2285, 1
    %2287 = vsyncpa [#allocation10], 1
    %s2288 = scalar_lea.sflag [#allocation10], 1
    %2289 = vsyncpa %s2288, 1

</llo_original>
